<compile_context>
chip_gen: v7x
topology: tpu7x:2x2x1
jax: 0.10.0
libtpu: 0.0.40
codegen_flags: <defaults>
</compile_context>

<pallas_src>
import numpy as np
import jax
import jax.numpy as jnp
from jax import lax
from jax.experimental import pallas as pl
from jax.experimental.pallas import tpu as pltpu

IMAGENET_MEAN = (0.485, 0.456, 0.406)
IMAGENET_STD = (0.229, 0.224, 0.225)


def _resize_weight_matrix(in_size: int, out_size: int, antialias: bool = True) -> np.ndarray:
    """(out_size, in_size) matrix reproducing ATen's antialiased bilinear resample."""
    scale = in_size / out_size
    if antialias and scale >= 1.0:
        support, invscale = scale, 1.0 / scale
    else:
        support, invscale = 1.0, 1.0
    w = np.zeros((out_size, in_size), dtype=np.float64)
    for i in range(out_size):
        center = scale * (i + 0.5)
        xmin = max(int(center - support + 0.5), 0)            # C-style truncation, clamped
        xmax = min(int(center + support + 0.5), in_size)
        js = np.arange(xmin, xmax, dtype=np.float64)
        t = (js - center + 0.5) * invscale
        wt = np.where(np.abs(t) < 1.0, 1.0 - np.abs(t), 0.0)
        total = wt.sum()
        if total > 0.0:
            wt = wt / total
        w[i, xmin:xmax] = wt
    return w


def _resized_hw(h: int, w: int, resize_size: int):
    """torchvision single-int resize: shortest side -> resize_size."""
    if h <= w:
        return resize_size, int(resize_size * w / h)
    return int(resize_size * h / w), resize_size


def _vmem_cap_bytes() -> int:
    """Generation-aware VMEM budget: ~80% of physical (51 MiB v7x, ~102 MiB v5e/v6e)."""
    try:
        phys = int(pltpu.get_tpu_info().vmem_capacity_bytes)
    except Exception:
        phys = 64 * 1024 * 1024        # conservative fallback: v7x physical VMEM
    return (phys * 4) // 5


def image_classification_preprocess(
    img,
    *,
    crop_size: int,
    resize_size: int = 256,
    mean=IMAGENET_MEAN,
    std=IMAGENET_STD,
    antialias: bool = True,
    precision=lax.Precision.DEFAULT,
    compute_dtype=None,
):
    img = jnp.asarray(img)
    squeeze = img.ndim == 3
    if squeeze:
        img = img[None]
    N, C, H, W = img.shape
    assert C == len(mean) == len(std)

    if compute_dtype is None:
        compute_dtype = jnp.float32 if precision == lax.Precision.HIGHEST else jnp.bfloat16
    compute_dtype = np.dtype(compute_dtype)

    # convert_image_dtype: uint8 -> float is x/255 (folded into the weights below);
    # float input passes through unchanged.  TODO(synk): other integer dtypes.
    if img.dtype == jnp.uint8:
        in_scale = 1.0 / 255.0
    else:
        if img.dtype not in (jnp.dtype(jnp.float32), jnp.dtype(jnp.bfloat16)):
            img = img.astype(jnp.float32)
        in_scale = 1.0

    new_h, new_w = _resized_hw(H, W, resize_size)
    crop = int(crop_size)
    # TODO(synk): torchvision pads when crop_size > resized size; unhandled here.
    assert crop <= new_h and crop <= new_w
    top = int(round((new_h - crop) / 2.0))
    left = int(round((new_w - crop) / 2.0))

    mean64 = np.asarray(mean, np.float64)
    std64 = np.asarray(std, np.float64)

    # Fold center crop, 1/255 (uint8) and 1/std into per-channel copies of the
    # height-resize matrix; -mean/std becomes a bias column added at the end.
    wh_crop = _resize_weight_matrix(H, new_h, antialias)[top:top + crop, :]          # (crop, H)
    ch_scale = in_scale / std64                                                      # (C,)
    wh_all = np.concatenate([wh_crop * ch_scale[c] for c in range(C)], axis=0)       # (C*crop, H)
    wwT = _resize_weight_matrix(W, new_w, antialias)[left:left + crop, :].T          # (W, crop)
    bias_col = np.repeat(-mean64 / std64, crop)[:, None].astype(np.float32)          # (C*crop, 1)

    in_isize = img.dtype.itemsize
    c_isize = compute_dtype.itemsize

    def vmem_bytes(h_tile, num_k):
        t_isize = 4 if num_k > 1 else c_isize
        b = 2 * C * h_tile * W * in_isize          # image block (double-buffered)
        b += 2 * C * crop * h_tile * c_isize       # wh block (advances with k)
        b += W * crop * c_isize + C * crop * 4     # wwT + bias (grid-invariant)
        b += 2 * C * crop * crop * 4               # output block (double-buffered)
        b += C * crop * crop * 4                   # width-matmul result temp
        b += C * crop * W * t_isize                # t scratch / accumulator
        b += 2 * (1 << 20)                         # compiler-internal headroom
        return b

    cap = _vmem_cap_bytes()
    if vmem_bytes(H, 1) <= cap:
        h_tile, num_k = H, 1
    else:
        # H-tiled contraction axis; h_tile must be a multiple of 128 (lane dim
        # of the wh block) when it does not cover the full H.
        h_tile = 128
        while h_tile + 128 < H and vmem_bytes(h_tile + 128, pl.cdiv(H, h_tile + 128)) <= cap:
            h_tile += 128
        num_k = pl.cdiv(H, h_tile)

    h_pad = h_tile * num_k
    if h_pad > H:
        # Zero-pad weight columns so the partially-OOB last image chunk
        # (masked to zero in-kernel) contributes exactly 0 to the accumulator.
        wh_all = np.pad(wh_all, ((0, 0), (0, h_pad - H)))

    t_dtype = np.dtype(jnp.float32) if num_k > 1 else compute_dtype
    wh_all_j = jnp.asarray(wh_all, dtype=compute_dtype)
    wwT_j = jnp.asarray(wwT, dtype=compute_dtype)
    bias_j = jnp.asarray(bias_col)

    def kernel(img_ref, wh_ref, wwT_ref, bias_ref, out_ref, t_ref):
        # img_ref: (C, h_tile, W)   wh_ref: (C*crop, h_tile)   wwT_ref: (W, crop)
        # bias_ref: (C*crop, 1)     out_ref: (C*crop, crop)    t_ref: (C*crop, W)
        k = pl.program_id(1)

        if num_k > 1:
            @pl.when(k == 0)
            def _():
                t_ref[...] = jnp.zeros_like(t_ref)

        if h_pad != H:
            row_ids = lax.broadcasted_iota(jnp.int32, (h_tile, W), 0)
            limit = H - k * h_tile

        for c in range(C):
            xc = img_ref[c].astype(jnp.float32).astype(compute_dtype)
            if h_pad != H:
                xc = jnp.where(row_ids < limit, xc, jnp.zeros_like(xc))
            contrib = jnp.dot(wh_ref[c * crop:(c + 1) * crop, :], xc,
                              preferred_element_type=t_dtype, precision=precision)
            if num_k == 1:
                t_ref[c * crop:(c + 1) * crop, :] = contrib
            else:
                t_ref[c * crop:(c + 1) * crop, :] += contrib

        def epilogue():
            # Fused width resize for all channels: (C*crop, W) @ (W, crop),
            # then one broadcasted bias add, one lane-dense store.
            r = jnp.dot(t_ref[...], wwT_ref[...],
                        preferred_element_type=jnp.float32, precision=precision)
            out_ref[...] = r + bias_ref[...]

        if num_k == 1:
            epilogue()
        else:
            pl.when(k == num_k - 1)(epilogue)

    grid_spec = pltpu.PrefetchScalarGridSpec(
        num_scalar_prefetch=0,
        grid=(N, num_k),
        in_specs=[
            pl.BlockSpec((None, C, h_tile, W), lambda n, k: (n, 0, k, 0)),
            pl.BlockSpec((C * crop, h_tile), lambda n, k: (0, k)),
            pl.BlockSpec((W, crop), lambda n, k: (0, 0)),
            pl.BlockSpec((C * crop, 1), lambda n, k: (0, 0)),
        ],
        out_specs=pl.BlockSpec((None, C * crop, crop), lambda n, k: (n, 0, 0)),
        scratch_shapes=[pltpu.VMEM((C * crop, W), t_dtype)],
    )

    vmem_limit = int(min(max(vmem_bytes(h_tile, num_k), 32 * 1024 * 1024), cap))

    out2d = pl.pallas_call(
        kernel,
        out_shape=jax.ShapeDtypeStruct((N, C * crop, crop), jnp.float32),
        grid_spec=grid_spec,
        compiler_params=pltpu.CompilerParams(
            dimension_semantics=("parallel", "arbitrary"),
            vmem_limit_bytes=vmem_limit,
        ),
    )(img, wh_all_j, wwT_j, bias_j)

    out = out2d.reshape(N, C, crop, crop)   # free reshape of contiguous memory
    return out[0] if squeeze else out


def _reference_numpy(img_f64, *, crop_size, resize_size, mean, std, antialias=True):
    """float64 numpy reference of the full preset (exact math, float input in [0,1])."""
    x = np.asarray(img_f64, np.float64)
    N, C, H, W = x.shape
    new_h, new_w = _resized_hw(H, W, resize_size)
    wh = _resize_weight_matrix(H, new_h, antialias)
    ww = _resize_weight_matrix(W, new_w, antialias)
    r = np.einsum('ah,nchw->ncaw', wh, x)
    r = np.einsum('ncaw,bw->ncab', r, ww)
    top = int(round((new_h - crop_size) / 2.0))
    left = int(round((new_w - crop_size) / 2.0))
    r = r[:, :, top:top + crop_size, left:left + crop_size]
    m = np.asarray(mean, np.float64)[None, :, None, None]
    s = np.asarray(std, np.float64)[None, :, None, None]
    return (r - m) / s


if __name__ == "__main__":
    key = jax.random.PRNGKey(0)
    N, C, H, W = 2, 3, 20, 24
    crop_size, resize_size = 8, 12

    # 1) float32 input, f32 compute, HIGHEST matmul precision: tight semantic
    #    check against the float64 reference of the linearized preset.
    x = jax.random.uniform(key, (N, C, H, W), dtype=jnp.float32)
    ref = _reference_numpy(np.asarray(x, np.float64), crop_size=crop_size,
                           resize_size=resize_size, mean=IMAGENET_MEAN,
                           std=IMAGENET_STD, antialias=True)
    out_hi = image_classification_preprocess(
        x, crop_size=crop_size, resize_size=resize_size,
        mean=IMAGENET_MEAN, std=IMAGENET_STD, antialias=True,
        precision=lax.Precision.HIGHEST)
    out_hi = jax.block_until_ready(out_hi)
    assert out_hi.shape == (N, C, crop_size, crop_size)
    np.testing.assert_allclose(np.asarray(out_hi), ref, rtol=1e-4, atol=1e-4)

    # 2) Production path: uint8 input straight into the kernel (4x less HBM DMA),
    #    bf16 weights/intermediate, DEFAULT MXU precision -> loose tolerance.
    x_u8 = jax.random.randint(jax.random.PRNGKey(1), (N, C, H, W), 0, 256,
                              dtype=jnp.int32).astype(jnp.uint8)
    ref_u8 = _reference_numpy(np.asarray(x_u8, np.float64) / 255.0, crop_size=crop_size,
                              resize_size=resize_size, mean=IMAGENET_MEAN,
                              std=IMAGENET_STD, antialias=True)
    out_u8 = image_classification_preprocess(
        x_u8, crop_size=crop_size, resize_size=resize_size,
        mean=IMAGENET_MEAN, std=IMAGENET_STD, antialias=True)
    out_u8 = jax.block_until_ready(out_u8)
    assert out_u8.shape == (N, C, crop_size, crop_size)
    np.testing.assert_allclose(np.asarray(out_u8), ref_u8, rtol=2e-2, atol=5e-2)

    print("KERNEL_OK")
</pallas_src>

<mosaic_0001>
module attributes {stable_mosaic.version = 11 : i64} {
  func.func @kernel(%arg0: i32, %arg1: i32, %arg2: memref<1x3x20x24xf32, #tpu.memory_space<vmem>>, %arg3: memref<24x20xf32, #tpu.memory_space<vmem>>, %arg4: memref<24x8xf32, #tpu.memory_space<vmem>>, %arg5: memref<24x1xf32, #tpu.memory_space<vmem>>, %arg6: memref<1x24x8xf32, #tpu.memory_space<vmem>>, %arg7: memref<24x24xf32, #tpu.memory_space<vmem>>) attributes {dimension_semantics = [#tpu.dimension_semantics<parallel>, #tpu.dimension_semantics<arbitrary>], iteration_bounds = array<i64: 2, 1>, scalar_prefetch = 0 : i64, scratch_operands = 1 : i64, tpu.core_type = #tpu.core_type<tc>, window_params = [{transform_indices = @transform_0, window_bounds = array<i64: 1, 3, 20, 24>}, {transform_indices = @transform_1, window_bounds = array<i64: 24, 20>}, {pipeline_mode = #tpu.pipeline_mode<synchronous>, transform_indices = @transform_2, window_bounds = array<i64: 24, 8>}, {pipeline_mode = #tpu.pipeline_mode<synchronous>, transform_indices = @transform_3, window_bounds = array<i64: 24, 1>}, {transform_indices = @transform_4, window_bounds = array<i64: 1, 24, 8>}]} {
    %c0 = arith.constant 0 : index
    %c0_0 = arith.constant 0 : index
    %c0_1 = arith.constant 0 : index
    %c0_2 = arith.constant 0 : index
    %0 = vector.load %arg2[%c0, %c0_0, %c0_1, %c0_2] : memref<1x3x20x24xf32, #tpu.memory_space<vmem>>, vector<1x1x20x24xf32>
    %1 = vector.shape_cast %0 : vector<1x1x20x24xf32> to vector<20x24xf32>
    %c0_3 = arith.constant 0 : index
    %c0_4 = arith.constant 0 : index
    %2 = vector.load %arg3[%c0_3, %c0_4] : memref<24x20xf32, #tpu.memory_space<vmem>>, vector<8x20xf32>
    %cst = arith.constant dense<0.000000e+00> : vector<8x24xf32>
    %3 = tpu.matmul %2, %1, %cst {dimension_numbers = #tpu.dot_dimension_numbers<[1], [0], [0], [1], [0, 0, 1, 1], [], []>, precision = #tpu.contract_precision<fp32>} : vector<8x20xf32>, vector<20x24xf32>, vector<8x24xf32> -> vector<8x24xf32>
    %c0_5 = arith.constant 0 : index
    %c0_6 = arith.constant 0 : index
    %4 = vector.load %arg7[%c0_5, %c0_6] : memref<24x24xf32, #tpu.memory_space<vmem>>, vector<8x24xf32>
    tpu.vector_store %arg7[%c0_5, %c0_6], %3 {strides = array<i32>} : memref<24x24xf32, #tpu.memory_space<vmem>>, vector<8x24xf32>,
    %c0_7 = arith.constant 0 : index
    %c1 = arith.constant 1 : index
    %c0_8 = arith.constant 0 : index
    %c0_9 = arith.constant 0 : index
    %5 = vector.load %arg2[%c0_7, %c1, %c0_8, %c0_9] : memref<1x3x20x24xf32, #tpu.memory_space<vmem>>, vector<1x1x20x24xf32>
    %6 = vector.shape_cast %5 : vector<1x1x20x24xf32> to vector<20x24xf32>
    %c8 = arith.constant 8 : index
    %c0_10 = arith.constant 0 : index
    %7 = vector.load %arg3[%c8, %c0_10] : memref<24x20xf32, #tpu.memory_space<vmem>>, vector<8x20xf32>
    %cst_11 = arith.constant dense<0.000000e+00> : vector<8x24xf32>
    %8 = tpu.matmul %7, %6, %cst_11 {dimension_numbers = #tpu.dot_dimension_numbers<[1], [0], [0], [1], [0, 0, 1, 1], [], []>, precision = #tpu.contract_precision<fp32>} : vector<8x20xf32>, vector<20x24xf32>, vector<8x24xf32> -> vector<8x24xf32>
    %c8_12 = arith.constant 8 : index
    %c0_13 = arith.constant 0 : index
    %9 = vector.load %arg7[%c8_12, %c0_13] : memref<24x24xf32, #tpu.memory_space<vmem>>, vector<8x24xf32>
    tpu.vector_store %arg7[%c8_12, %c0_13], %8 {strides = array<i32>} : memref<24x24xf32, #tpu.memory_space<vmem>>, vector<8x24xf32>,
    %c0_14 = arith.constant 0 : index
    %c2 = arith.constant 2 : index
    %c0_15 = arith.constant 0 : index
    %c0_16 = arith.constant 0 : index
    %10 = vector.load %arg2[%c0_14, %c2, %c0_15, %c0_16] : memref<1x3x20x24xf32, #tpu.memory_space<vmem>>, vector<1x1x20x24xf32>
    %11 = vector.shape_cast %10 : vector<1x1x20x24xf32> to vector<20x24xf32>
    %c16 = arith.constant 16 : index
    %c0_17 = arith.constant 0 : index
    %12 = vector.load %arg3[%c16, %c0_17] : memref<24x20xf32, #tpu.memory_space<vmem>>, vector<8x20xf32>
    %cst_18 = arith.constant dense<0.000000e+00> : vector<8x24xf32>
    %13 = tpu.matmul %12, %11, %cst_18 {dimension_numbers = #tpu.dot_dimension_numbers<[1], [0], [0], [1], [0, 0, 1, 1], [], []>, precision = #tpu.contract_precision<fp32>} : vector<8x20xf32>, vector<20x24xf32>, vector<8x24xf32> -> vector<8x24xf32>
    %c16_19 = arith.constant 16 : index
    %c0_20 = arith.constant 0 : index
    %14 = vector.load %arg7[%c16_19, %c0_20] : memref<24x24xf32, #tpu.memory_space<vmem>>, vector<8x24xf32>
    tpu.vector_store %arg7[%c16_19, %c0_20], %13 {strides = array<i32>} : memref<24x24xf32, #tpu.memory_space<vmem>>, vector<8x24xf32>,
    %c0_21 = arith.constant 0 : index
    %c0_22 = arith.constant 0 : index
    %15 = vector.load %arg7[%c0_21, %c0_22] : memref<24x24xf32, #tpu.memory_space<vmem>>, vector<24x24xf32>
    %c0_23 = arith.constant 0 : index
    %c0_24 = arith.constant 0 : index
    %16 = vector.load %arg4[%c0_23, %c0_24] : memref<24x8xf32, #tpu.memory_space<vmem>>, vector<24x8xf32>
    %cst_25 = arith.constant dense<0.000000e+00> : vector<24x8xf32>
    %17 = tpu.matmul %15, %16, %cst_25 {dimension_numbers = #tpu.dot_dimension_numbers<[1], [0], [0], [1], [0, 0, 1, 1], [], []>, precision = #tpu.contract_precision<fp32>} : vector<24x24xf32>, vector<24x8xf32>, vector<24x8xf32> -> vector<24x8xf32>
    %c0_26 = arith.constant 0 : index
    %c0_27 = arith.constant 0 : index
    %18 = vector.load %arg5[%c0_26, %c0_27] : memref<24x1xf32, #tpu.memory_space<vmem>>, vector<24x1xf32>
    %19 = vector.broadcast %18 : vector<24x1xf32> to vector<24x8xf32>
    %20 = arith.addf %17, %19 : vector<24x8xf32>
    %c0_28 = arith.constant 0 : index
    %c0_29 = arith.constant 0 : index
    %c0_30 = arith.constant 0 : index
    %21 = vector.load %arg6[%c0_28, %c0_29, %c0_30] : memref<1x24x8xf32, #tpu.memory_space<vmem>>, vector<1x24x8xf32>
    %22 = vector.shape_cast %21 : vector<1x24x8xf32> to vector<24x8xf32>
    %23 = vector.shape_cast %20 : vector<24x8xf32> to vector<1x24x8xf32>
    tpu.vector_store %arg6[%c0_28, %c0_29, %c0_30], %23 {strides = array<i32>} : memref<1x24x8xf32, #tpu.memory_space<vmem>>, vector<1x24x8xf32>,
    return
  }
  func.func @transform_0(%arg0: i32, %arg1: i32) -> (i32, i32, i32, i32) {
    %c0_i32 = arith.constant 0 : i32
    %c0_i32_0 = arith.constant 0 : i32
    %c0_i32_1 = arith.constant 0 : i32
    return %arg0, %c0_i32, %arg1, %c0_i32_0 : i32, i32, i32, i32
  }
  func.func @transform_1(%arg0: i32, %arg1: i32) -> (i32, i32) {
    %c0_i32 = arith.constant 0 : i32
    %c0_i32_0 = arith.constant 0 : i32
    return %c0_i32, %arg1 : i32, i32
  }
  func.func @transform_2(%arg0: i32, %arg1: i32) -> (i32, i32) {
    %c0_i32 = arith.constant 0 : i32
    %c0_i32_0 = arith.constant 0 : i32
    %c0_i32_1 = arith.constant 0 : i32
    return %c0_i32, %c0_i32_0 : i32, i32
  }
  func.func @transform_3(%arg0: i32, %arg1: i32) -> (i32, i32) {
    %c0_i32 = arith.constant 0 : i32
    %c0_i32_0 = arith.constant 0 : i32
    %c0_i32_1 = arith.constant 0 : i32
    return %c0_i32, %c0_i32_0 : i32, i32
  }
  func.func @transform_4(%arg0: i32, %arg1: i32) -> (i32, i32, i32) {
    %c0_i32 = arith.constant 0 : i32
    %c0_i32_0 = arith.constant 0 : i32
    %c0_i32_1 = arith.constant 0 : i32
    return %arg0, %c0_i32, %c0_i32_0 : i32, i32, i32
  }
}

</mosaic_0001>

<llo_original>
// kernel: tpu_custom_call.1
$region0: #{tpu_custom_call.1}
  #allocation0 [shape = 'u32[]', space=smem, size = 0x4, offset = 0x4, fixed_abs, tag = 'smem constant byte address 0x4 - core index']
  #allocation1 [shape = 'u32[144,128]{1,0:T(1,128)}', space=vmem, size = 0x12000, scoped, tag = 'internal scratch']
  #allocation2 [shape = 'f32[24,24]{1,0:T(8,128)}', space=vmem, size = 0x3000, scoped, tag = 'scratch operand']
  %s0 = inlined_call_operand.vmem [shape: f32[2,3,20,24], index: 0, kind: input, shape index: {}]
  %s1 = inlined_call_operand.vmem [shape: f32[24,20], index: 1, kind: input, shape index: {}]
  %s2 = inlined_call_operand.vmem [shape: f32[24,8], index: 2, kind: input, shape index: {}]
  %s3 = inlined_call_operand.vmem [shape: f32[24,1], index: 3, kind: input, shape index: {}]
  %s4 = inlined_call_operand.vmem [shape: f32[2,24,8], index: 4, kind: output, shape index: {}]
  %s5 = sld [smem:[#allocation0]]
  $region49: #{tpu_custom_call.1} parent=0
    _
  %s7 = ssub.s32 1, %s5
  %s8 = scalar_select 0, %s7, %s5
  loop: start=0, step=1, limit=4
  $region2: #{tpu_custom_call.1} parent=0 // loop_pre_header
    _
  $region3: #{tpu_custom_call.1} parent=0 // loop_header
    %s10 = sphi 0, %s14
    %p11 = scmp.ge.s32.totalorder %s10, 4
    %s17 = sphi 0, %s29
    %s18 = sphi 0, %s25
    %s19 = sphi 0, %s17
    %s20 = sphi 0, %s18
    %s21 = sphi 0, %s19
    %s22 = sphi 0, %s20
    %s34 = sphi 0, %s36
    %s37 = sphi 0, %s34
    %s38 = sphi 0, %s37
    %s54 = sphi 0, %s38
    %s60 = sphi 0, %s62
    %s63 = sphi 0, %s60
    %s64 = sphi 0, %s63
    %s80 = sphi 0, %s64
    %s84 = sphi 0, %s84
    %s86 = sphi 0, %s84
    %s87 = sphi 0, %s86
    %s101 = sphi 0, %s87
    %s105 = sphi 0, %s105
    %s107 = sphi 0, %s105
    %s108 = sphi 0, %s107
    %s122 = sphi 0, %s108
    %s128 = sphi 0, %s130
    %s131 = sphi 0, %s128
    %s132 = sphi 0, %s131
    %s148 = sphi 0, %s132
  $region4: #{tpu_custom_call.1} parent=0 // loop_header_branch
    %13 = sbr.rel (%p11) target = $region8
  $region5: #{tpu_custom_call.1} parent=0 // loop_body
    %s15 = ssub.s32 %s10, 1
    %s16 = ssub.s32 %s10, 2
    %s23 = sadd.s32 1, %s18
    %p24 = scmp.ge.s32.totalorder %s23, 1
    %s25 = scalar_select %p24, 0, %s23
    %s26 = sadd.s32 1, %s17
    %s27 = scalar_select %p24, %s26, %s17
    %p28 = scmp.ge.s32.totalorder %s27, 2
    %s29 = scalar_select %p28, 0, %s27
    %s30 = ssub.s32 %s17, %s29
    %s31 = ssub.s32 %s18, %s25
    %s32 = sor.u32 %s30, %s31
    %p33 = scmp.eq.s32.totalorder %s32, 0
    %s35 = sadd.s32 %s34, 1
    %s36 = scalar_select %p33, %s34, %s35
    %p39 = pneg %p33
    %p40 = scmp.eq.s32.totalorder %s10, 1
    %p41 = por %p39, %p40
    %p42 = scmp.ne.s32.totalorder %s34, %s37
    %p43 = scmp.eq.s32.totalorder %s10, 0
    %p44 = por %p42, %p43
    %p45 = scmp.ne.s32.totalorder %s34, %s37
    %p46 = scmp.eq.s32.totalorder %s15, 1
    %p47 = por %p45, %p46
    %p48 = scmp.ne.s32.totalorder %s37, %s38
    %p49 = scmp.eq.s32.totalorder %s15, 0
    %p50 = por %p48, %p49
    %p51 = scmp.ne.s32.totalorder %s37, %s38
    %p52 = scmp.eq.s32.totalorder %s16, 1
    %p53 = por %p51, %p52
    %p55 = scmp.ne.s32.totalorder %s38, %s54
    %p56 = scmp.eq.s32.totalorder %s16, 0
    %p57 = por %p55, %p56
    %s58 = ssub.s32 %s18, %s25
    %p59 = scmp.eq.s32.totalorder %s58, 0
    %s61 = sadd.s32 %s60, 1
    %s62 = scalar_select %p59, %s60, %s61
    %p65 = pneg %p59
    %p66 = scmp.eq.s32.totalorder %s10, 1
    %p67 = por %p65, %p66
    %p68 = scmp.ne.s32.totalorder %s60, %s63
    %p69 = scmp.eq.s32.totalorder %s10, 0
    %p70 = por %p68, %p69
    %p71 = scmp.ne.s32.totalorder %s60, %s63
    %p72 = scmp.eq.s32.totalorder %s15, 1
    %p73 = por %p71, %p72
    %p74 = scmp.ne.s32.totalorder %s63, %s64
    %p75 = scmp.eq.s32.totalorder %s15, 0
    %p76 = por %p74, %p75
    %p77 = scmp.ne.s32.totalorder %s63, %s64
    %p78 = scmp.eq.s32.totalorder %s16, 1
    %p79 = por %p77, %p78
    %p81 = scmp.ne.s32.totalorder %s64, %s80
    %p82 = scmp.eq.s32.totalorder %s16, 0
    %p83 = por %p81, %p82
    %s85 = sadd.s32 %s84, 1
    %p88 = scmp.eq.s32.totalorder %s10, 1
    %p89 = scmp.ne.s32.totalorder %s84, %s86
    %p90 = scmp.eq.s32.totalorder %s10, 0
    %p91 = por %p89, %p90
    %p92 = scmp.ne.s32.totalorder %s84, %s86
    %p93 = scmp.eq.s32.totalorder %s15, 1
    %p94 = por %p92, %p93
    %p95 = scmp.ne.s32.totalorder %s86, %s87
    %p96 = scmp.eq.s32.totalorder %s15, 0
    %p97 = por %p95, %p96
    %p98 = scmp.ne.s32.totalorder %s86, %s87
    %p99 = scmp.eq.s32.totalorder %s16, 1
    %p100 = por %p98, %p99
    %p102 = scmp.ne.s32.totalorder %s87, %s101
    %p103 = scmp.eq.s32.totalorder %s16, 0
    %p104 = por %p102, %p103
    %s106 = sadd.s32 %s105, 1
    %p109 = scmp.eq.s32.totalorder %s10, 1
    %p110 = scmp.ne.s32.totalorder %s105, %s107
    %p111 = scmp.eq.s32.totalorder %s10, 0
    %p112 = por %p110, %p111
    %p113 = scmp.ne.s32.totalorder %s105, %s107
    %p114 = scmp.eq.s32.totalorder %s15, 1
    %p115 = por %p113, %p114
    %p116 = scmp.ne.s32.totalorder %s107, %s108
    %p117 = scmp.eq.s32.totalorder %s15, 0
    %p118 = por %p116, %p117
    %p119 = scmp.ne.s32.totalorder %s107, %s108
    %p120 = scmp.eq.s32.totalorder %s16, 1
    %p121 = por %p119, %p120
    %p123 = scmp.ne.s32.totalorder %s108, %s122
    %p124 = scmp.eq.s32.totalorder %s16, 0
    %p125 = por %p123, %p124
    %s126 = ssub.s32 %s17, %s29
    %p127 = scmp.eq.s32.totalorder %s126, 0
    %s129 = sadd.s32 %s128, 1
    %s130 = scalar_select %p127, %s128, %s129
    %p133 = pneg %p127
    %p134 = scmp.eq.s32.totalorder %s10, 1
    %p135 = por %p133, %p134
    %p136 = scmp.ne.s32.totalorder %s128, %s131
    %p137 = scmp.eq.s32.totalorder %s10, 0
    %p138 = por %p136, %p137
    %p139 = scmp.ne.s32.totalorder %s128, %s131
    %p140 = scmp.eq.s32.totalorder %s15, 1
    %p141 = por %p139, %p140
    %p142 = scmp.ne.s32.totalorder %s131, %s132
    %p143 = scmp.eq.s32.totalorder %s15, 0
    %p144 = por %p142, %p143
    %p145 = scmp.ne.s32.totalorder %s131, %s132
    %p146 = scmp.eq.s32.totalorder %s16, 1
    %p147 = por %p145, %p146
    %p149 = scmp.ne.s32.totalorder %s132, %s148
    %p150 = scmp.eq.s32.totalorder %s16, 0
    %p151 = por %p149, %p150
    %p152 = scmp.le.s32.totalorder 1, %s10
    %p153 = scmp.lt.s32.totalorder %s10, 3
    %p154 = pnand %p152, %p153
    %p155 = pneg %p154
    // Predicated region
    $region9: #{tpu_custom_call.1} parent=5 // pred_check
      _
    $region10: #{tpu_custom_call.1} parent=5 // pred_check_branch
      %157 = sbr.rel (%p154) target = $region12
    $region11: #{tpu_custom_call.1} parent=5 // pred_region
      %s158 = ssub.s32 %s10, 1
      // Predicated region
      $region13: #{tpu_custom_call.1} parent=11 // pred_check
        %p159 = pneg %p76
      $region14: #{tpu_custom_call.1} parent=11 // pred_check_branch
        %161 = sbr.rel (%p159) target = $region16
      $region15: #{tpu_custom_call.1} parent=11 // pred_region
        %p162 = scmp.lt.s32.totalorder %s20, 0
        %s163 = scalar_select %p162, %s20, 0
        %s164 = smul.addr %s163, 8
        %s165 = scalar_lea.vmem %s1, %s164
      $region16: #{tpu_custom_call.1} parent=11 // pred_fallthru
        _
      // Predicated region
      $region17: #{tpu_custom_call.1} parent=11 // pred_check
        %p166 = pneg %p97
      $region18: #{tpu_custom_call.1} parent=11 // pred_check_branch
        %168 = sbr.rel (%p166) target = $region20
      $region19: #{tpu_custom_call.1} parent=11 // pred_region
        _
      $region20: #{tpu_custom_call.1} parent=11 // pred_fallthru
        _
      // Predicated region
      $region21: #{tpu_custom_call.1} parent=11 // pred_check
        %p169 = pneg %p118
      $region22: #{tpu_custom_call.1} parent=11 // pred_check_branch
        %171 = sbr.rel (%p169) target = $region24
      $region23: #{tpu_custom_call.1} parent=11 // pred_region
        _
      $region24: #{tpu_custom_call.1} parent=11 // pred_fallthru
        _
    $region12: #{tpu_custom_call.1} parent=5 // pred_fallthru
      _
    %p172 = scmp.lt.s32.totalorder %s10, 2
    // Predicated region
    $region25: #{tpu_custom_call.1} parent=5 // pred_check
      %p173 = pneg %p172
    $region26: #{tpu_custom_call.1} parent=5 // pred_check_branch
      %175 = sbr.rel (%p173) target = $region28
    $region27: #{tpu_custom_call.1} parent=5 // pred_region
      // Predicated region
      $region29: #{tpu_custom_call.1} parent=27 // pred_check
        %p176 = pneg %p44
      $region30: #{tpu_custom_call.1} parent=27 // pred_check_branch
        %178 = sbr.rel (%p176) target = $region32
      $region31: #{tpu_custom_call.1} parent=27 // pred_region
        %s179 = smul.u32 3, %s18
        %p180 = scmp.lt.s32.totalorder %s17, 1
        %s181 = scalar_select %p180, %s17, 1
        %p182 = scmp.lt.s32.totalorder %s179, 2
        %s183 = scalar_select %p182, %s179, 2
        %s184 = smul.addr %s181, 9
        %s185 = sadd.s32 %s183, %s184
        %s186 = smul.addr %s185, 8
        %s187 = scalar_lea.vmem %s0, %s186
        %s188 = smul.u32 3, %s18
      $region32: #{tpu_custom_call.1} parent=27 // pred_fallthru
        _
    $region28: #{tpu_custom_call.1} parent=5 // pred_fallthru
      _
    %p189 = scmp.le.s32.totalorder 1, %s10
    %p190 = scmp.lt.s32.totalorder %s10, 3
    %p191 = pnand %p189, %p190
    %p192 = pneg %p191
    // Predicated region
    $region33: #{tpu_custom_call.1} parent=5 // pred_check
      _
    $region34: #{tpu_custom_call.1} parent=5 // pred_check_branch
      %194 = sbr.rel (%p191) target = $region36
    $region35: #{tpu_custom_call.1} parent=5 // pred_region
      %s195 = ssub.s32 %s10, 1
      %s196 = smul.u32 3, %s20
      %p197 = scmp.lt.s32.totalorder %s19, 1
      %s198 = scalar_select %p197, %s19, 1
      %p199 = scmp.lt.s32.totalorder %s196, 2
      %s200 = scalar_select %p199, %s196, 2
      %s201 = smul.addr %s198, 9
      %s202 = sadd.s32 %s200, %s201
      %s203 = smul.addr %s202, 8
      %s204 = scalar_lea.vmem %s0, %s203
      %p205 = pneg %p50
      %p206 = pneg %p47
      %p207 = scmp.lt.s32.totalorder %s20, 0
      %s208 = scalar_select %p207, %s20, 0
      %s209 = smul.addr %s208, 8
      %s210 = scalar_lea.vmem %s1, %s209
      %p211 = pneg %p76
      %p212 = pneg %p73
      %p213 = pneg %p97
      %p214 = pneg %p94
      %p215 = pneg %p118
      %p216 = pneg %p115
      %p217 = pneg %p144
      %p218 = pneg %p141
      %p219 = scmp.lt.s32.totalorder %s19, 1
      %s220 = scalar_select %p219, %s19, 1
      %s221 = smul.addr %s220, 3
      %s222 = smul.addr %s221, 8
      %s223 = scalar_lea.vmem %s4, %s222
      %s224 = smul.u32 3, %s20
      %p225 = scmp.lt.s32.totalorder %s19, 1
      %s226 = scalar_select %p225, %s19, 1
      %p227 = scmp.lt.s32.totalorder %s224, 2
      %s228 = scalar_select %p227, %s224, 2
      %s229 = smul.addr %s226, 9
      %s230 = sadd.s32 %s228, %s229
      %s231 = smul.addr %s230, 8
      %s232 = scalar_lea.vmem %s0, %s231
      %s233 = smul.u32 3, %s20
      %p234 = scmp.lt.s32.totalorder %s20, 0
      %s235 = scalar_select %p234, %s20, 0
      %s236 = smul.addr %s235, 8
      %s237 = scalar_lea.vmem %s1, %s236
      %p238 = scmp.lt.s32.totalorder %s19, 1
      %s239 = scalar_select %p238, %s19, 1
      %s240 = smul.addr %s239, 3
      %s241 = smul.addr %s240, 8
      %s242 = scalar_lea.vmem %s4, %s241
      %v243 = vld [vmem:[%s232] sm:$0xff]
      %v244 = vld [vmem:[%s232 + $0x8] sm:$0xff]
      %v245 = vld [vmem:[%s232 + $0x10] sm:$0xf]
      %v246 = vld [vmem:[%s237] sm:$0xff]
      %vm247 = vcmask 162816
      %v249 = vsel %vm247, %v246, 0
      %vm251 = vcmask 1043456
      %v253 = vsel %vm251, %v245, 0
      %255 = vmatprep.subr.mxu0 0.0
      %v256 = vand.u32 %v243, 4294901760
      %257 = vmatpush1.msra.mxu0 %v256
      %258 = vmatprep.subr.mxu0 0.0
      %v259 = vand.u32 %v244, 4294901760
      %260 = vmatpush1.msra.mxu0 %v259
      %261 = vmatprep.subr.mxu0 0.0
      %v262 = vand.u32 %v253, 4294901760
      %263 = vmatpush1.msra.mxu0 %v262
      %264 = vmatprep.subr.mxu0 0.0
      %265 = vmatpush1.msra.mxu0 0.0
      %266 = vmatprep.subr.mxu0 0.0
      %267 = vmatpush1.msra.mxu0 0.0
      %268 = vmatprep.subr.mxu0 0.0
      %269 = vmatpush1.msra.mxu0 0.0
      %270 = vmatprep.subr.mxu0 0.0
      %271 = vmatpush1.msra.mxu0 0.0
      %272 = vmatprep.subr.mxu0 0.0
      %273 = vmatpush1.msra.mxu0 0.0
      %274 = vmatprep.subr.mxu0 0.0
      %275 = vmatpush1.msra.mxu0 0.0
      %276 = vmatprep.subr.mxu0 0.0
      %277 = vmatpush1.msra.mxu0 0.0
      %278 = vmatprep.subr.mxu0 0.0
      %279 = vmatpush1.msra.mxu0 0.0
      %280 = vmatprep.subr.mxu0 0.0
      %281 = vmatpush1.msra.mxu0 0.0
      %282 = vmatprep.subr.mxu0 0.0
      %283 = vmatpush1.msra.mxu0 0.0
      %284 = vmatprep.subr.mxu0 0.0
      %285 = vmatpush1.msra.mxu0 0.0
      %286 = vmatprep.subr.mxu0 0.0
      %287 = vmatpush1.msra.mxu0 0.0
      %288 = vmatprep.subr.mxu0 0.0
      %289 = vmatpush1.msra.mxu0 0.0
      %290 = vmatprep.subr.mxu0 0.0
      %291 = vmatpush1.msra.mxu0 0.0
      %292 = vmatprep.subr.mxu0 0.0
      %293 = vmatpush1.msra.mxu0 0.0
      %294 = vmatprep.subr.mxu0 0.0
      %295 = vmatpush1.msra.mxu0 0.0
      %296 = vmatprep.subr.mxu0 0.0
      %297 = vmatpush1.msra.mxu0 0.0
      %298 = vmatprep.subr.mxu0 0.0
      %299 = vmatpush1.msra.mxu0 0.0
      %300 = vmatprep.subr.mxu0 0.0
      %301 = vmatpush1.msra.mxu0 0.0
      %302 = vmatprep.subr.mxu0 0.0
      %303 = vmatpush1.msra.mxu0 0.0
      %304 = vmatprep.subr.mxu0 0.0
      %305 = vmatpush1.msra.mxu0 0.0
      %306 = vmatprep.subr.mxu0 0.0
      %307 = vmatpush1.msra.mxu0 0.0
      %308 = vmatprep.subr.mxu0 0.0
      %309 = vmatpush1.msra.mxu0 0.0
      %310 = vmatprep.subr.mxu0 0.0
      %311 = vmatpush1.msra.mxu0 0.0
      %312 = vmatprep.subr.mxu0 0.0
      %313 = vmatpush1.msra.mxu0 0.0
      %314 = vmatprep.subr.mxu0 0.0
      %315 = vmatpush1.msra.mxu0 0.0
      %316 = vmatprep.subr.mxu0 0.0
      %317 = vmatpush1.msra.mxu0 0.0
      %318 = vmatprep.subr.mxu0 0.0
      %319 = vmatpush1.msra.mxu0 0.0
      %320 = vmatprep.subr.mxu0 0.0
      %321 = vmatpush1.msra.mxu0 0.0
      %322 = vmatprep.mubr.f32.mxu0 0.0
      %v323 = vand.u32 %v249, 4294901760
      %v324 = vsub.f32 %v249, %v323
      %v325 = vand.u32 %v324, 4294901760
      %v326 = vsub.f32 %v324, %v325
      %v327 = vand.u32 %v326, 4294901760
      %328 = vmatmul.mubr.f32.gmra.mrb[0].mxu0 %v327
      %v329 = vpop.f32.mrb[0].mxu0
      %v330 = vadd.f32 0.0, %v329
      %v331 = vpop.f32.mrb[0].mxu0
      %332 = vdwg.mxu0
      %333 = vmatprep.subr.mxu0 0.0
      %v334 = vand.u32 %v243, 4294901760
      %v335 = vsub.f32 %v243, %v334
      %v336 = vand.u32 %v335, 4294901760
      %v337 = vsub.f32 %v335, %v336
      %v338 = vand.u32 %v337, 4294901760
      %339 = vmatpush1.msra.mxu0 %v338
      %340 = vmatprep.subr.mxu0 0.0
      %v341 = vand.u32 %v244, 4294901760
      %v342 = vsub.f32 %v244, %v341
      %v343 = vand.u32 %v342, 4294901760
      %v344 = vsub.f32 %v342, %v343
      %v345 = vand.u32 %v344, 4294901760
      %346 = vmatpush1.msra.mxu0 %v345
      %347 = vmatprep.subr.mxu0 0.0
      %v348 = vand.u32 %v253, 4294901760
      %v349 = vsub.f32 %v253, %v348
      %v350 = vand.u32 %v349, 4294901760
      %v351 = vsub.f32 %v349, %v350
      %v352 = vand.u32 %v351, 4294901760
      %353 = vmatpush1.msra.mxu0 %v352
      %354 = vmatprep.subr.mxu0 0.0
      %355 = vmatpush1.msra.mxu0 0.0
      %356 = vmatprep.subr.mxu0 0.0
      %357 = vmatpush1.msra.mxu0 0.0
      %358 = vmatprep.subr.mxu0 0.0
      %359 = vmatpush1.msra.mxu0 0.0
      %360 = vmatprep.subr.mxu0 0.0
      %361 = vmatpush1.msra.mxu0 0.0
      %362 = vmatprep.subr.mxu0 0.0
      %363 = vmatpush1.msra.mxu0 0.0
      %364 = vmatprep.subr.mxu0 0.0
      %365 = vmatpush1.msra.mxu0 0.0
      %366 = vmatprep.subr.mxu0 0.0
      %367 = vmatpush1.msra.mxu0 0.0
      %368 = vmatprep.subr.mxu0 0.0
      %369 = vmatpush1.msra.mxu0 0.0
      %370 = vmatprep.subr.mxu0 0.0
      %371 = vmatpush1.msra.mxu0 0.0
      %372 = vmatprep.subr.mxu0 0.0
      %373 = vmatpush1.msra.mxu0 0.0
      %374 = vmatprep.subr.mxu0 0.0
      %375 = vmatpush1.msra.mxu0 0.0
      %376 = vmatprep.subr.mxu0 0.0
      %377 = vmatpush1.msra.mxu0 0.0
      %378 = vmatprep.subr.mxu0 0.0
      %379 = vmatpush1.msra.mxu0 0.0
      %380 = vmatprep.subr.mxu0 0.0
      %381 = vmatpush1.msra.mxu0 0.0
      %382 = vmatprep.subr.mxu0 0.0
      %383 = vmatpush1.msra.mxu0 0.0
      %384 = vmatprep.subr.mxu0 0.0
      %385 = vmatpush1.msra.mxu0 0.0
      %386 = vmatprep.subr.mxu0 0.0
      %387 = vmatpush1.msra.mxu0 0.0
      %388 = vmatprep.subr.mxu0 0.0
      %389 = vmatpush1.msra.mxu0 0.0
      %390 = vmatprep.subr.mxu0 0.0
      %391 = vmatpush1.msra.mxu0 0.0
      %392 = vmatprep.subr.mxu0 0.0
      %393 = vmatpush1.msra.mxu0 0.0
      %394 = vmatprep.subr.mxu0 0.0
      %395 = vmatpush1.msra.mxu0 0.0
      %396 = vmatprep.subr.mxu0 0.0
      %397 = vmatpush1.msra.mxu0 0.0
      %398 = vmatprep.subr.mxu0 0.0
      %399 = vmatpush1.msra.mxu0 0.0
      %400 = vmatprep.subr.mxu0 0.0
      %401 = vmatpush1.msra.mxu0 0.0
      %402 = vmatprep.subr.mxu0 0.0
      %403 = vmatpush1.msra.mxu0 0.0
      %404 = vmatprep.subr.mxu0 0.0
      %405 = vmatpush1.msra.mxu0 0.0
      %406 = vmatprep.subr.mxu0 0.0
      %407 = vmatpush1.msra.mxu0 0.0
      %408 = vmatprep.subr.mxu0 0.0
      %409 = vmatpush1.msra.mxu0 0.0
      %410 = vmatprep.subr.mxu0 0.0
      %411 = vmatpush1.msra.mxu0 0.0
      %412 = vmatprep.mubr.f32.mxu0 0.0
      %v413 = vand.u32 %v249, 4294901760
      %414 = vmatmul.mubr.f32.gmra.mrb[0].mxu0 %v413
      %v415 = vpop.f32.mrb[0].mxu0
      %v416 = vadd.f32 %v330, %v415
      %v417 = vpop.f32.mrb[0].mxu0
      %418 = vdwg.mxu0
      %419 = vmatprep.subr.mxu0 0.0
      %v420 = vand.u32 %v243, 4294901760
      %v421 = vsub.f32 %v243, %v420
      %422 = vmatpush1.msra.mxu0 %v421
      %423 = vmatprep.subr.mxu0 0.0
      %v424 = vand.u32 %v244, 4294901760
      %v425 = vsub.f32 %v244, %v424
      %426 = vmatpush1.msra.mxu0 %v425
      %427 = vmatprep.subr.mxu0 0.0
      %v428 = vand.u32 %v253, 4294901760
      %v429 = vsub.f32 %v253, %v428
      %430 = vmatpush1.msra.mxu0 %v429
      %431 = vmatprep.subr.mxu0 0.0
      %432 = vmatpush1.msra.mxu0 0.0
      %433 = vmatprep.subr.mxu0 0.0
      %434 = vmatpush1.msra.mxu0 0.0
      %435 = vmatprep.subr.mxu0 0.0
      %436 = vmatpush1.msra.mxu0 0.0
      %437 = vmatprep.subr.mxu0 0.0
      %438 = vmatpush1.msra.mxu0 0.0
      %439 = vmatprep.subr.mxu0 0.0
      %440 = vmatpush1.msra.mxu0 0.0
      %441 = vmatprep.subr.mxu0 0.0
      %442 = vmatpush1.msra.mxu0 0.0
      %443 = vmatprep.subr.mxu0 0.0
      %444 = vmatpush1.msra.mxu0 0.0
      %445 = vmatprep.subr.mxu0 0.0
      %446 = vmatpush1.msra.mxu0 0.0
      %447 = vmatprep.subr.mxu0 0.0
      %448 = vmatpush1.msra.mxu0 0.0
      %449 = vmatprep.subr.mxu0 0.0
      %450 = vmatpush1.msra.mxu0 0.0
      %451 = vmatprep.subr.mxu0 0.0
      %452 = vmatpush1.msra.mxu0 0.0
      %453 = vmatprep.subr.mxu0 0.0
      %454 = vmatpush1.msra.mxu0 0.0
      %455 = vmatprep.subr.mxu0 0.0
      %456 = vmatpush1.msra.mxu0 0.0
      %457 = vmatprep.subr.mxu0 0.0
      %458 = vmatpush1.msra.mxu0 0.0
      %459 = vmatprep.subr.mxu0 0.0
      %460 = vmatpush1.msra.mxu0 0.0
      %461 = vmatprep.subr.mxu0 0.0
      %462 = vmatpush1.msra.mxu0 0.0
      %463 = vmatprep.subr.mxu0 0.0
      %464 = vmatpush1.msra.mxu0 0.0
      %465 = vmatprep.subr.mxu0 0.0
      %466 = vmatpush1.msra.mxu0 0.0
      %467 = vmatprep.subr.mxu0 0.0
      %468 = vmatpush1.msra.mxu0 0.0
      %469 = vmatprep.subr.mxu0 0.0
      %470 = vmatpush1.msra.mxu0 0.0
      %471 = vmatprep.subr.mxu0 0.0
      %472 = vmatpush1.msra.mxu0 0.0
      %473 = vmatprep.subr.mxu0 0.0
      %474 = vmatpush1.msra.mxu0 0.0
      %475 = vmatprep.subr.mxu0 0.0
      %476 = vmatpush1.msra.mxu0 0.0
      %477 = vmatprep.subr.mxu0 0.0
      %478 = vmatpush1.msra.mxu0 0.0
      %479 = vmatprep.subr.mxu0 0.0
      %480 = vmatpush1.msra.mxu0 0.0
      %481 = vmatprep.subr.mxu0 0.0
      %482 = vmatpush1.msra.mxu0 0.0
      %483 = vmatprep.subr.mxu0 0.0
      %484 = vmatpush1.msra.mxu0 0.0
      %485 = vmatprep.subr.mxu0 0.0
      %486 = vmatpush1.msra.mxu0 0.0
      %487 = vmatprep.subr.mxu0 0.0
      %488 = vmatpush1.msra.mxu0 0.0
      %489 = vmatprep.mubr.f32.mxu0 0.0
      %v490 = vand.u32 %v249, 4294901760
      %v491 = vsub.f32 %v249, %v490
      %492 = vmatmul.mubr.f32.gmra.mrb[0].mxu0 %v491
      %v493 = vpop.f32.mrb[0].mxu0
      %v494 = vadd.f32 %v416, %v493
      %v495 = vpop.f32.mrb[0].mxu0
      %496 = vdwg.mxu0
      %497 = vmatprep.subr.mxu0 0.0
      %v498 = vand.u32 %v243, 4294901760
      %499 = vmatpush1.msra.mxu0 %v498
      %500 = vmatprep.subr.mxu0 0.0
      %v501 = vand.u32 %v244, 4294901760
      %502 = vmatpush1.msra.mxu0 %v501
      %503 = vmatprep.subr.mxu0 0.0
      %v504 = vand.u32 %v253, 4294901760
      %505 = vmatpush1.msra.mxu0 %v504
      %506 = vmatprep.subr.mxu0 0.0
      %507 = vmatpush1.msra.mxu0 0.0
      %508 = vmatprep.subr.mxu0 0.0
      %509 = vmatpush1.msra.mxu0 0.0
      %510 = vmatprep.subr.mxu0 0.0
      %511 = vmatpush1.msra.mxu0 0.0
      %512 = vmatprep.subr.mxu0 0.0
      %513 = vmatpush1.msra.mxu0 0.0
      %514 = vmatprep.subr.mxu0 0.0
      %515 = vmatpush1.msra.mxu0 0.0
      %516 = vmatprep.subr.mxu0 0.0
      %517 = vmatpush1.msra.mxu0 0.0
      %518 = vmatprep.subr.mxu0 0.0
      %519 = vmatpush1.msra.mxu0 0.0
      %520 = vmatprep.subr.mxu0 0.0
      %521 = vmatpush1.msra.mxu0 0.0
      %522 = vmatprep.subr.mxu0 0.0
      %523 = vmatpush1.msra.mxu0 0.0
      %524 = vmatprep.subr.mxu0 0.0
      %525 = vmatpush1.msra.mxu0 0.0
      %526 = vmatprep.subr.mxu0 0.0
      %527 = vmatpush1.msra.mxu0 0.0
      %528 = vmatprep.subr.mxu0 0.0
      %529 = vmatpush1.msra.mxu0 0.0
      %530 = vmatprep.subr.mxu0 0.0
      %531 = vmatpush1.msra.mxu0 0.0
      %532 = vmatprep.subr.mxu0 0.0
      %533 = vmatpush1.msra.mxu0 0.0
      %534 = vmatprep.subr.mxu0 0.0
      %535 = vmatpush1.msra.mxu0 0.0
      %536 = vmatprep.subr.mxu0 0.0
      %537 = vmatpush1.msra.mxu0 0.0
      %538 = vmatprep.subr.mxu0 0.0
      %539 = vmatpush1.msra.mxu0 0.0
      %540 = vmatprep.subr.mxu0 0.0
      %541 = vmatpush1.msra.mxu0 0.0
      %542 = vmatprep.subr.mxu0 0.0
      %543 = vmatpush1.msra.mxu0 0.0
      %544 = vmatprep.subr.mxu0 0.0
      %545 = vmatpush1.msra.mxu0 0.0
      %546 = vmatprep.subr.mxu0 0.0
      %547 = vmatpush1.msra.mxu0 0.0
      %548 = vmatprep.subr.mxu0 0.0
      %549 = vmatpush1.msra.mxu0 0.0
      %550 = vmatprep.subr.mxu0 0.0
      %551 = vmatpush1.msra.mxu0 0.0
      %552 = vmatprep.subr.mxu0 0.0
      %553 = vmatpush1.msra.mxu0 0.0
      %554 = vmatprep.subr.mxu0 0.0
      %555 = vmatpush1.msra.mxu0 0.0
      %556 = vmatprep.subr.mxu0 0.0
      %557 = vmatpush1.msra.mxu0 0.0
      %558 = vmatprep.subr.mxu0 0.0
      %559 = vmatpush1.msra.mxu0 0.0
      %560 = vmatprep.subr.mxu0 0.0
      %561 = vmatpush1.msra.mxu0 0.0
      %562 = vmatprep.subr.mxu0 0.0
      %563 = vmatpush1.msra.mxu0 0.0
      %564 = vmatprep.mubr.f32.mxu0 0.0
      %v565 = vand.u32 %v249, 4294901760
      %v566 = vsub.f32 %v249, %v565
      %v567 = vand.u32 %v566, 4294901760
      %568 = vmatmul.mubr.f32.gmra.mrb[0].mxu0 %v567
      %v569 = vpop.f32.mrb[0].mxu0
      %v570 = vadd.f32 %v494, %v569
      %v571 = vpop.f32.mrb[0].mxu0
      %572 = vdwg.mxu0
      %573 = vmatprep.subr.mxu0 0.0
      %v574 = vand.u32 %v243, 4294901760
      %v575 = vsub.f32 %v243, %v574
      %v576 = vand.u32 %v575, 4294901760
      %577 = vmatpush1.msra.mxu0 %v576
      %578 = vmatprep.subr.mxu0 0.0
      %v579 = vand.u32 %v244, 4294901760
      %v580 = vsub.f32 %v244, %v579
      %v581 = vand.u32 %v580, 4294901760
      %582 = vmatpush1.msra.mxu0 %v581
      %583 = vmatprep.subr.mxu0 0.0
      %v584 = vand.u32 %v253, 4294901760
      %v585 = vsub.f32 %v253, %v584
      %v586 = vand.u32 %v585, 4294901760
      %587 = vmatpush1.msra.mxu0 %v586
      %588 = vmatprep.subr.mxu0 0.0
      %589 = vmatpush1.msra.mxu0 0.0
      %590 = vmatprep.subr.mxu0 0.0
      %591 = vmatpush1.msra.mxu0 0.0
      %592 = vmatprep.subr.mxu0 0.0
      %593 = vmatpush1.msra.mxu0 0.0
      %594 = vmatprep.subr.mxu0 0.0
      %595 = vmatpush1.msra.mxu0 0.0
      %596 = vmatprep.subr.mxu0 0.0
      %597 = vmatpush1.msra.mxu0 0.0
      %598 = vmatprep.subr.mxu0 0.0
      %599 = vmatpush1.msra.mxu0 0.0
      %600 = vmatprep.subr.mxu0 0.0
      %601 = vmatpush1.msra.mxu0 0.0
      %602 = vmatprep.subr.mxu0 0.0
      %603 = vmatpush1.msra.mxu0 0.0
      %604 = vmatprep.subr.mxu0 0.0
      %605 = vmatpush1.msra.mxu0 0.0
      %606 = vmatprep.subr.mxu0 0.0
      %607 = vmatpush1.msra.mxu0 0.0
      %608 = vmatprep.subr.mxu0 0.0
      %609 = vmatpush1.msra.mxu0 0.0
      %610 = vmatprep.subr.mxu0 0.0
      %611 = vmatpush1.msra.mxu0 0.0
      %612 = vmatprep.subr.mxu0 0.0
      %613 = vmatpush1.msra.mxu0 0.0
      %614 = vmatprep.subr.mxu0 0.0
      %615 = vmatpush1.msra.mxu0 0.0
      %616 = vmatprep.subr.mxu0 0.0
      %617 = vmatpush1.msra.mxu0 0.0
      %618 = vmatprep.subr.mxu0 0.0
      %619 = vmatpush1.msra.mxu0 0.0
      %620 = vmatprep.subr.mxu0 0.0
      %621 = vmatpush1.msra.mxu0 0.0
      %622 = vmatprep.subr.mxu0 0.0
      %623 = vmatpush1.msra.mxu0 0.0
      %624 = vmatprep.subr.mxu0 0.0
      %625 = vmatpush1.msra.mxu0 0.0
      %626 = vmatprep.subr.mxu0 0.0
      %627 = vmatpush1.msra.mxu0 0.0
      %628 = vmatprep.subr.mxu0 0.0
      %629 = vmatpush1.msra.mxu0 0.0
      %630 = vmatprep.subr.mxu0 0.0
      %631 = vmatpush1.msra.mxu0 0.0
      %632 = vmatprep.subr.mxu0 0.0
      %633 = vmatpush1.msra.mxu0 0.0
      %634 = vmatprep.subr.mxu0 0.0
      %635 = vmatpush1.msra.mxu0 0.0
      %636 = vmatprep.subr.mxu0 0.0
      %637 = vmatpush1.msra.mxu0 0.0
      %638 = vmatprep.subr.mxu0 0.0
      %639 = vmatpush1.msra.mxu0 0.0
      %640 = vmatprep.subr.mxu0 0.0
      %641 = vmatpush1.msra.mxu0 0.0
      %642 = vmatprep.subr.mxu0 0.0
      %643 = vmatpush1.msra.mxu0 0.0
      %644 = vmatprep.subr.mxu0 0.0
      %645 = vmatpush1.msra.mxu0 0.0
      %646 = vmatprep.mubr.f32.mxu0 0.0
      %v647 = vand.u32 %v249, 4294901760
      %648 = vmatmul.mubr.f32.gmra.mrb[0].mxu0 %v647
      %v649 = vpop.f32.mrb[0].mxu0
      %v650 = vadd.f32 %v570, %v649
      %v651 = vpop.f32.mrb[0].mxu0
      %652 = vdwg.mxu0
      %653 = vmatprep.subr.mxu0 0.0
      %v654 = vand.u32 %v243, 4294901760
      %655 = vmatpush1.msra.mxu0 %v654
      %656 = vmatprep.subr.mxu0 0.0
      %v657 = vand.u32 %v244, 4294901760
      %658 = vmatpush1.msra.mxu0 %v657
      %659 = vmatprep.subr.mxu0 0.0
      %v660 = vand.u32 %v253, 4294901760
      %661 = vmatpush1.msra.mxu0 %v660
      %662 = vmatprep.subr.mxu0 0.0
      %663 = vmatpush1.msra.mxu0 0.0
      %664 = vmatprep.subr.mxu0 0.0
      %665 = vmatpush1.msra.mxu0 0.0
      %666 = vmatprep.subr.mxu0 0.0
      %667 = vmatpush1.msra.mxu0 0.0
      %668 = vmatprep.subr.mxu0 0.0
      %669 = vmatpush1.msra.mxu0 0.0
      %670 = vmatprep.subr.mxu0 0.0
      %671 = vmatpush1.msra.mxu0 0.0
      %672 = vmatprep.subr.mxu0 0.0
      %673 = vmatpush1.msra.mxu0 0.0
      %674 = vmatprep.subr.mxu0 0.0
      %675 = vmatpush1.msra.mxu0 0.0
      %676 = vmatprep.subr.mxu0 0.0
      %677 = vmatpush1.msra.mxu0 0.0
      %678 = vmatprep.subr.mxu0 0.0
      %679 = vmatpush1.msra.mxu0 0.0
      %680 = vmatprep.subr.mxu0 0.0
      %681 = vmatpush1.msra.mxu0 0.0
      %682 = vmatprep.subr.mxu0 0.0
      %683 = vmatpush1.msra.mxu0 0.0
      %684 = vmatprep.subr.mxu0 0.0
      %685 = vmatpush1.msra.mxu0 0.0
      %686 = vmatprep.subr.mxu0 0.0
      %687 = vmatpush1.msra.mxu0 0.0
      %688 = vmatprep.subr.mxu0 0.0
      %689 = vmatpush1.msra.mxu0 0.0
      %690 = vmatprep.subr.mxu0 0.0
      %691 = vmatpush1.msra.mxu0 0.0
      %692 = vmatprep.subr.mxu0 0.0
      %693 = vmatpush1.msra.mxu0 0.0
      %694 = vmatprep.subr.mxu0 0.0
      %695 = vmatpush1.msra.mxu0 0.0
      %696 = vmatprep.subr.mxu0 0.0
      %697 = vmatpush1.msra.mxu0 0.0
      %698 = vmatprep.subr.mxu0 0.0
      %699 = vmatpush1.msra.mxu0 0.0
      %700 = vmatprep.subr.mxu0 0.0
      %701 = vmatpush1.msra.mxu0 0.0
      %702 = vmatprep.subr.mxu0 0.0
      %703 = vmatpush1.msra.mxu0 0.0
      %704 = vmatprep.subr.mxu0 0.0
      %705 = vmatpush1.msra.mxu0 0.0
      %706 = vmatprep.subr.mxu0 0.0
      %707 = vmatpush1.msra.mxu0 0.0
      %708 = vmatprep.subr.mxu0 0.0
      %709 = vmatpush1.msra.mxu0 0.0
      %710 = vmatprep.subr.mxu0 0.0
      %711 = vmatpush1.msra.mxu0 0.0
      %712 = vmatprep.subr.mxu0 0.0
      %713 = vmatpush1.msra.mxu0 0.0
      %714 = vmatprep.subr.mxu0 0.0
      %715 = vmatpush1.msra.mxu0 0.0
      %716 = vmatprep.subr.mxu0 0.0
      %717 = vmatpush1.msra.mxu0 0.0
      %718 = vmatprep.subr.mxu0 0.0
      %719 = vmatpush1.msra.mxu0 0.0
      %720 = vmatprep.mubr.f32.mxu0 0.0
      %v721 = vand.u32 %v249, 4294901760
      %722 = vmatmul.mubr.f32.gmra.mrb[0].mxu0 %v721
      %v723 = vpop.f32.mrb[0].mxu0
      %v724 = vadd.f32 %v650, %v723
      %v725 = vpop.f32.mrb[0].mxu0
      %726 = vdwg.mxu0
      %vm727 = vcmask 195584
      %728 = vst.msk [vmem:[#allocation2] sm:$0xff] %vm727, %v724
      %s729 = scalar_lea.vmem %s232, 24
      %v730 = vld [vmem:[%s729] sm:$0xff]
      %v731 = vld [vmem:[%s729 + $0x8] sm:$0xff]
      %v732 = vld [vmem:[%s729 + $0x10] sm:$0xf]
      %v733 = vld [vmem:[%s237 + $0x8] sm:$0xff]
      %v735 = vsel %vm247, %v733, 0
      %v738 = vsel %vm251, %v732, 0
      %740 = vmatprep.subr.mxu0 0.0
      %v741 = vand.u32 %v730, 4294901760
      %742 = vmatpush1.msra.mxu0 %v741
      %743 = vmatprep.subr.mxu0 0.0
      %v744 = vand.u32 %v731, 4294901760
      %745 = vmatpush1.msra.mxu0 %v744
      %746 = vmatprep.subr.mxu0 0.0
      %v747 = vand.u32 %v738, 4294901760
      %748 = vmatpush1.msra.mxu0 %v747
      %749 = vmatprep.subr.mxu0 0.0
      %750 = vmatpush1.msra.mxu0 0.0
      %751 = vmatprep.subr.mxu0 0.0
      %752 = vmatpush1.msra.mxu0 0.0
      %753 = vmatprep.subr.mxu0 0.0
      %754 = vmatpush1.msra.mxu0 0.0
      %755 = vmatprep.subr.mxu0 0.0
      %756 = vmatpush1.msra.mxu0 0.0
      %757 = vmatprep.subr.mxu0 0.0
      %758 = vmatpush1.msra.mxu0 0.0
      %759 = vmatprep.subr.mxu0 0.0
      %760 = vmatpush1.msra.mxu0 0.0
      %761 = vmatprep.subr.mxu0 0.0
      %762 = vmatpush1.msra.mxu0 0.0
      %763 = vmatprep.subr.mxu0 0.0
      %764 = vmatpush1.msra.mxu0 0.0
      %765 = vmatprep.subr.mxu0 0.0
      %766 = vmatpush1.msra.mxu0 0.0
      %767 = vmatprep.subr.mxu0 0.0
      %768 = vmatpush1.msra.mxu0 0.0
      %769 = vmatprep.subr.mxu0 0.0
      %770 = vmatpush1.msra.mxu0 0.0
      %771 = vmatprep.subr.mxu0 0.0
      %772 = vmatpush1.msra.mxu0 0.0
      %773 = vmatprep.subr.mxu0 0.0
      %774 = vmatpush1.msra.mxu0 0.0
      %775 = vmatprep.subr.mxu0 0.0
      %776 = vmatpush1.msra.mxu0 0.0
      %777 = vmatprep.subr.mxu0 0.0
      %778 = vmatpush1.msra.mxu0 0.0
      %779 = vmatprep.subr.mxu0 0.0
      %780 = vmatpush1.msra.mxu0 0.0
      %781 = vmatprep.subr.mxu0 0.0
      %782 = vmatpush1.msra.mxu0 0.0
      %783 = vmatprep.subr.mxu0 0.0
      %784 = vmatpush1.msra.mxu0 0.0
      %785 = vmatprep.subr.mxu0 0.0
      %786 = vmatpush1.msra.mxu0 0.0
      %787 = vmatprep.subr.mxu0 0.0
      %788 = vmatpush1.msra.mxu0 0.0
      %789 = vmatprep.subr.mxu0 0.0
      %790 = vmatpush1.msra.mxu0 0.0
      %791 = vmatprep.subr.mxu0 0.0
      %792 = vmatpush1.msra.mxu0 0.0
      %793 = vmatprep.subr.mxu0 0.0
      %794 = vmatpush1.msra.mxu0 0.0
      %795 = vmatprep.subr.mxu0 0.0
      %796 = vmatpush1.msra.mxu0 0.0
      %797 = vmatprep.subr.mxu0 0.0
      %798 = vmatpush1.msra.mxu0 0.0
      %799 = vmatprep.subr.mxu0 0.0
      %800 = vmatpush1.msra.mxu0 0.0
      %801 = vmatprep.subr.mxu0 0.0
      %802 = vmatpush1.msra.mxu0 0.0
      %803 = vmatprep.subr.mxu0 0.0
      %804 = vmatpush1.msra.mxu0 0.0
      %805 = vmatprep.subr.mxu0 0.0
      %806 = vmatpush1.msra.mxu0 0.0
      %807 = vmatprep.mubr.f32.mxu0 0.0
      %v808 = vand.u32 %v735, 4294901760
      %v809 = vsub.f32 %v735, %v808
      %v810 = vand.u32 %v809, 4294901760
      %v811 = vsub.f32 %v809, %v810
      %v812 = vand.u32 %v811, 4294901760
      %813 = vmatmul.mubr.f32.gmra.mrb[0].mxu0 %v812
      %v814 = vpop.f32.mrb[0].mxu0
      %v815 = vadd.f32 0.0, %v814
      %v816 = vpop.f32.mrb[0].mxu0
      %817 = vdwg.mxu0
      %818 = vmatprep.subr.mxu0 0.0
      %v819 = vand.u32 %v730, 4294901760
      %v820 = vsub.f32 %v730, %v819
      %v821 = vand.u32 %v820, 4294901760
      %v822 = vsub.f32 %v820, %v821
      %v823 = vand.u32 %v822, 4294901760
      %824 = vmatpush1.msra.mxu0 %v823
      %825 = vmatprep.subr.mxu0 0.0
      %v826 = vand.u32 %v731, 4294901760
      %v827 = vsub.f32 %v731, %v826
      %v828 = vand.u32 %v827, 4294901760
      %v829 = vsub.f32 %v827, %v828
      %v830 = vand.u32 %v829, 4294901760
      %831 = vmatpush1.msra.mxu0 %v830
      %832 = vmatprep.subr.mxu0 0.0
      %v833 = vand.u32 %v738, 4294901760
      %v834 = vsub.f32 %v738, %v833
      %v835 = vand.u32 %v834, 4294901760
      %v836 = vsub.f32 %v834, %v835
      %v837 = vand.u32 %v836, 4294901760
      %838 = vmatpush1.msra.mxu0 %v837
      %839 = vmatprep.subr.mxu0 0.0
      %840 = vmatpush1.msra.mxu0 0.0
      %841 = vmatprep.subr.mxu0 0.0
      %842 = vmatpush1.msra.mxu0 0.0
      %843 = vmatprep.subr.mxu0 0.0
      %844 = vmatpush1.msra.mxu0 0.0
      %845 = vmatprep.subr.mxu0 0.0
      %846 = vmatpush1.msra.mxu0 0.0
      %847 = vmatprep.subr.mxu0 0.0
      %848 = vmatpush1.msra.mxu0 0.0
      %849 = vmatprep.subr.mxu0 0.0
      %850 = vmatpush1.msra.mxu0 0.0
      %851 = vmatprep.subr.mxu0 0.0
      %852 = vmatpush1.msra.mxu0 0.0
      %853 = vmatprep.subr.mxu0 0.0
      %854 = vmatpush1.msra.mxu0 0.0
      %855 = vmatprep.subr.mxu0 0.0
      %856 = vmatpush1.msra.mxu0 0.0
      %857 = vmatprep.subr.mxu0 0.0
      %858 = vmatpush1.msra.mxu0 0.0
      %859 = vmatprep.subr.mxu0 0.0
      %860 = vmatpush1.msra.mxu0 0.0
      %861 = vmatprep.subr.mxu0 0.0
      %862 = vmatpush1.msra.mxu0 0.0
      %863 = vmatprep.subr.mxu0 0.0
      %864 = vmatpush1.msra.mxu0 0.0
      %865 = vmatprep.subr.mxu0 0.0
      %866 = vmatpush1.msra.mxu0 0.0
      %867 = vmatprep.subr.mxu0 0.0
      %868 = vmatpush1.msra.mxu0 0.0
      %869 = vmatprep.subr.mxu0 0.0
      %870 = vmatpush1.msra.mxu0 0.0
      %871 = vmatprep.subr.mxu0 0.0
      %872 = vmatpush1.msra.mxu0 0.0
      %873 = vmatprep.subr.mxu0 0.0
      %874 = vmatpush1.msra.mxu0 0.0
      %875 = vmatprep.subr.mxu0 0.0
      %876 = vmatpush1.msra.mxu0 0.0
      %877 = vmatprep.subr.mxu0 0.0
      %878 = vmatpush1.msra.mxu0 0.0
      %879 = vmatprep.subr.mxu0 0.0
      %880 = vmatpush1.msra.mxu0 0.0
      %881 = vmatprep.subr.mxu0 0.0
      %882 = vmatpush1.msra.mxu0 0.0
      %883 = vmatprep.subr.mxu0 0.0
      %884 = vmatpush1.msra.mxu0 0.0
      %885 = vmatprep.subr.mxu0 0.0
      %886 = vmatpush1.msra.mxu0 0.0
      %887 = vmatprep.subr.mxu0 0.0
      %888 = vmatpush1.msra.mxu0 0.0
      %889 = vmatprep.subr.mxu0 0.0
      %890 = vmatpush1.msra.mxu0 0.0
      %891 = vmatprep.subr.mxu0 0.0
      %892 = vmatpush1.msra.mxu0 0.0
      %893 = vmatprep.subr.mxu0 0.0
      %894 = vmatpush1.msra.mxu0 0.0
      %895 = vmatprep.subr.mxu0 0.0
      %896 = vmatpush1.msra.mxu0 0.0
      %897 = vmatprep.mubr.f32.mxu0 0.0
      %v898 = vand.u32 %v735, 4294901760
      %899 = vmatmul.mubr.f32.gmra.mrb[0].mxu0 %v898
      %v900 = vpop.f32.mrb[0].mxu0
      %v901 = vadd.f32 %v815, %v900
      %v902 = vpop.f32.mrb[0].mxu0
      %903 = vdwg.mxu0
      %904 = vmatprep.subr.mxu0 0.0
      %v905 = vand.u32 %v730, 4294901760
      %v906 = vsub.f32 %v730, %v905
      %907 = vmatpush1.msra.mxu0 %v906
      %908 = vmatprep.subr.mxu0 0.0
      %v909 = vand.u32 %v731, 4294901760
      %v910 = vsub.f32 %v731, %v909
      %911 = vmatpush1.msra.mxu0 %v910
      %912 = vmatprep.subr.mxu0 0.0
      %v913 = vand.u32 %v738, 4294901760
      %v914 = vsub.f32 %v738, %v913
      %915 = vmatpush1.msra.mxu0 %v914
      %916 = vmatprep.subr.mxu0 0.0
      %917 = vmatpush1.msra.mxu0 0.0
      %918 = vmatprep.subr.mxu0 0.0
      %919 = vmatpush1.msra.mxu0 0.0
      %920 = vmatprep.subr.mxu0 0.0
      %921 = vmatpush1.msra.mxu0 0.0
      %922 = vmatprep.subr.mxu0 0.0
      %923 = vmatpush1.msra.mxu0 0.0
      %924 = vmatprep.subr.mxu0 0.0
      %925 = vmatpush1.msra.mxu0 0.0
      %926 = vmatprep.subr.mxu0 0.0
      %927 = vmatpush1.msra.mxu0 0.0
      %928 = vmatprep.subr.mxu0 0.0
      %929 = vmatpush1.msra.mxu0 0.0
      %930 = vmatprep.subr.mxu0 0.0
      %931 = vmatpush1.msra.mxu0 0.0
      %932 = vmatprep.subr.mxu0 0.0
      %933 = vmatpush1.msra.mxu0 0.0
      %934 = vmatprep.subr.mxu0 0.0
      %935 = vmatpush1.msra.mxu0 0.0
      %936 = vmatprep.subr.mxu0 0.0
      %937 = vmatpush1.msra.mxu0 0.0
      %938 = vmatprep.subr.mxu0 0.0
      %939 = vmatpush1.msra.mxu0 0.0
      %940 = vmatprep.subr.mxu0 0.0
      %941 = vmatpush1.msra.mxu0 0.0
      %942 = vmatprep.subr.mxu0 0.0
      %943 = vmatpush1.msra.mxu0 0.0
      %944 = vmatprep.subr.mxu0 0.0
      %945 = vmatpush1.msra.mxu0 0.0
      %946 = vmatprep.subr.mxu0 0.0
      %947 = vmatpush1.msra.mxu0 0.0
      %948 = vmatprep.subr.mxu0 0.0
      %949 = vmatpush1.msra.mxu0 0.0
      %950 = vmatprep.subr.mxu0 0.0
      %951 = vmatpush1.msra.mxu0 0.0
      %952 = vmatprep.subr.mxu0 0.0
      %953 = vmatpush1.msra.mxu0 0.0
      %954 = vmatprep.subr.mxu0 0.0
      %955 = vmatpush1.msra.mxu0 0.0
      %956 = vmatprep.subr.mxu0 0.0
      %957 = vmatpush1.msra.mxu0 0.0
      %958 = vmatprep.subr.mxu0 0.0
      %959 = vmatpush1.msra.mxu0 0.0
      %960 = vmatprep.subr.mxu0 0.0
      %961 = vmatpush1.msra.mxu0 0.0
      %962 = vmatprep.subr.mxu0 0.0
      %963 = vmatpush1.msra.mxu0 0.0
      %964 = vmatprep.subr.mxu0 0.0
      %965 = vmatpush1.msra.mxu0 0.0
      %966 = vmatprep.subr.mxu0 0.0
      %967 = vmatpush1.msra.mxu0 0.0
      %968 = vmatprep.subr.mxu0 0.0
      %969 = vmatpush1.msra.mxu0 0.0
      %970 = vmatprep.subr.mxu0 0.0
      %971 = vmatpush1.msra.mxu0 0.0
      %972 = vmatprep.subr.mxu0 0.0
      %973 = vmatpush1.msra.mxu0 0.0
      %974 = vmatprep.mubr.f32.mxu0 0.0
      %v975 = vand.u32 %v735, 4294901760
      %v976 = vsub.f32 %v735, %v975
      %977 = vmatmul.mubr.f32.gmra.mrb[0].mxu0 %v976
      %v978 = vpop.f32.mrb[0].mxu0
      %v979 = vadd.f32 %v901, %v978
      %v980 = vpop.f32.mrb[0].mxu0
      %981 = vdwg.mxu0
      %982 = vmatprep.subr.mxu0 0.0
      %v983 = vand.u32 %v730, 4294901760
      %984 = vmatpush1.msra.mxu0 %v983
      %985 = vmatprep.subr.mxu0 0.0
      %v986 = vand.u32 %v731, 4294901760
      %987 = vmatpush1.msra.mxu0 %v986
      %988 = vmatprep.subr.mxu0 0.0
      %v989 = vand.u32 %v738, 4294901760
      %990 = vmatpush1.msra.mxu0 %v989
      %991 = vmatprep.subr.mxu0 0.0
      %992 = vmatpush1.msra.mxu0 0.0
      %993 = vmatprep.subr.mxu0 0.0
      %994 = vmatpush1.msra.mxu0 0.0
      %995 = vmatprep.subr.mxu0 0.0
      %996 = vmatpush1.msra.mxu0 0.0
      %997 = vmatprep.subr.mxu0 0.0
      %998 = vmatpush1.msra.mxu0 0.0
      %999 = vmatprep.subr.mxu0 0.0
      %1000 = vmatpush1.msra.mxu0 0.0
      %1001 = vmatprep.subr.mxu0 0.0
      %1002 = vmatpush1.msra.mxu0 0.0
      %1003 = vmatprep.subr.mxu0 0.0
      %1004 = vmatpush1.msra.mxu0 0.0
      %1005 = vmatprep.subr.mxu0 0.0
      %1006 = vmatpush1.msra.mxu0 0.0
      %1007 = vmatprep.subr.mxu0 0.0
      %1008 = vmatpush1.msra.mxu0 0.0
      %1009 = vmatprep.subr.mxu0 0.0
      %1010 = vmatpush1.msra.mxu0 0.0
      %1011 = vmatprep.subr.mxu0 0.0
      %1012 = vmatpush1.msra.mxu0 0.0
      %1013 = vmatprep.subr.mxu0 0.0
      %1014 = vmatpush1.msra.mxu0 0.0
      %1015 = vmatprep.subr.mxu0 0.0
      %1016 = vmatpush1.msra.mxu0 0.0
      %1017 = vmatprep.subr.mxu0 0.0
      %1018 = vmatpush1.msra.mxu0 0.0
      %1019 = vmatprep.subr.mxu0 0.0
      %1020 = vmatpush1.msra.mxu0 0.0
      %1021 = vmatprep.subr.mxu0 0.0
      %1022 = vmatpush1.msra.mxu0 0.0
      %1023 = vmatprep.subr.mxu0 0.0
      %1024 = vmatpush1.msra.mxu0 0.0
      %1025 = vmatprep.subr.mxu0 0.0
      %1026 = vmatpush1.msra.mxu0 0.0
      %1027 = vmatprep.subr.mxu0 0.0
      %1028 = vmatpush1.msra.mxu0 0.0
      %1029 = vmatprep.subr.mxu0 0.0
      %1030 = vmatpush1.msra.mxu0 0.0
      %1031 = vmatprep.subr.mxu0 0.0
      %1032 = vmatpush1.msra.mxu0 0.0
      %1033 = vmatprep.subr.mxu0 0.0
      %1034 = vmatpush1.msra.mxu0 0.0
      %1035 = vmatprep.subr.mxu0 0.0
      %1036 = vmatpush1.msra.mxu0 0.0
      %1037 = vmatprep.subr.mxu0 0.0
      %1038 = vmatpush1.msra.mxu0 0.0
      %1039 = vmatprep.subr.mxu0 0.0
      %1040 = vmatpush1.msra.mxu0 0.0
      %1041 = vmatprep.subr.mxu0 0.0
      %1042 = vmatpush1.msra.mxu0 0.0
      %1043 = vmatprep.subr.mxu0 0.0
      %1044 = vmatpush1.msra.mxu0 0.0
      %1045 = vmatprep.subr.mxu0 0.0
      %1046 = vmatpush1.msra.mxu0 0.0
      %1047 = vmatprep.subr.mxu0 0.0
      %1048 = vmatpush1.msra.mxu0 0.0
      %1049 = vmatprep.mubr.f32.mxu0 0.0
      %v1050 = vand.u32 %v735, 4294901760
      %v1051 = vsub.f32 %v735, %v1050
      %v1052 = vand.u32 %v1051, 4294901760
      %1053 = vmatmul.mubr.f32.gmra.mrb[0].mxu0 %v1052
      %v1054 = vpop.f32.mrb[0].mxu0
      %v1055 = vadd.f32 %v979, %v1054
      %v1056 = vpop.f32.mrb[0].mxu0
      %1057 = vdwg.mxu0
      %1058 = vmatprep.subr.mxu0 0.0
      %v1059 = vand.u32 %v730, 4294901760
      %v1060 = vsub.f32 %v730, %v1059
      %v1061 = vand.u32 %v1060, 4294901760
      %1062 = vmatpush1.msra.mxu0 %v1061
      %1063 = vmatprep.subr.mxu0 0.0
      %v1064 = vand.u32 %v731, 4294901760
      %v1065 = vsub.f32 %v731, %v1064
      %v1066 = vand.u32 %v1065, 4294901760
      %1067 = vmatpush1.msra.mxu0 %v1066
      %1068 = vmatprep.subr.mxu0 0.0
      %v1069 = vand.u32 %v738, 4294901760
      %v1070 = vsub.f32 %v738, %v1069
      %v1071 = vand.u32 %v1070, 4294901760
      %1072 = vmatpush1.msra.mxu0 %v1071
      %1073 = vmatprep.subr.mxu0 0.0
      %1074 = vmatpush1.msra.mxu0 0.0
      %1075 = vmatprep.subr.mxu0 0.0
      %1076 = vmatpush1.msra.mxu0 0.0
      %1077 = vmatprep.subr.mxu0 0.0
      %1078 = vmatpush1.msra.mxu0 0.0
      %1079 = vmatprep.subr.mxu0 0.0
      %1080 = vmatpush1.msra.mxu0 0.0
      %1081 = vmatprep.subr.mxu0 0.0
      %1082 = vmatpush1.msra.mxu0 0.0
      %1083 = vmatprep.subr.mxu0 0.0
      %1084 = vmatpush1.msra.mxu0 0.0
      %1085 = vmatprep.subr.mxu0 0.0
      %1086 = vmatpush1.msra.mxu0 0.0
      %1087 = vmatprep.subr.mxu0 0.0
      %1088 = vmatpush1.msra.mxu0 0.0
      %1089 = vmatprep.subr.mxu0 0.0
      %1090 = vmatpush1.msra.mxu0 0.0
      %1091 = vmatprep.subr.mxu0 0.0
      %1092 = vmatpush1.msra.mxu0 0.0
      %1093 = vmatprep.subr.mxu0 0.0
      %1094 = vmatpush1.msra.mxu0 0.0
      %1095 = vmatprep.subr.mxu0 0.0
      %1096 = vmatpush1.msra.mxu0 0.0
      %1097 = vmatprep.subr.mxu0 0.0
      %1098 = vmatpush1.msra.mxu0 0.0
      %1099 = vmatprep.subr.mxu0 0.0
      %1100 = vmatpush1.msra.mxu0 0.0
      %1101 = vmatprep.subr.mxu0 0.0
      %1102 = vmatpush1.msra.mxu0 0.0
      %1103 = vmatprep.subr.mxu0 0.0
      %1104 = vmatpush1.msra.mxu0 0.0
      %1105 = vmatprep.subr.mxu0 0.0
      %1106 = vmatpush1.msra.mxu0 0.0
      %1107 = vmatprep.subr.mxu0 0.0
      %1108 = vmatpush1.msra.mxu0 0.0
      %1109 = vmatprep.subr.mxu0 0.0
      %1110 = vmatpush1.msra.mxu0 0.0
      %1111 = vmatprep.subr.mxu0 0.0
      %1112 = vmatpush1.msra.mxu0 0.0
      %1113 = vmatprep.subr.mxu0 0.0
      %1114 = vmatpush1.msra.mxu0 0.0
      %1115 = vmatprep.subr.mxu0 0.0
      %1116 = vmatpush1.msra.mxu0 0.0
      %1117 = vmatprep.subr.mxu0 0.0
      %1118 = vmatpush1.msra.mxu0 0.0
      %1119 = vmatprep.subr.mxu0 0.0
      %1120 = vmatpush1.msra.mxu0 0.0
      %1121 = vmatprep.subr.mxu0 0.0
      %1122 = vmatpush1.msra.mxu0 0.0
      %1123 = vmatprep.subr.mxu0 0.0
      %1124 = vmatpush1.msra.mxu0 0.0
      %1125 = vmatprep.subr.mxu0 0.0
      %1126 = vmatpush1.msra.mxu0 0.0
      %1127 = vmatprep.subr.mxu0 0.0
      %1128 = vmatpush1.msra.mxu0 0.0
      %1129 = vmatprep.subr.mxu0 0.0
      %1130 = vmatpush1.msra.mxu0 0.0
      %1131 = vmatprep.mubr.f32.mxu0 0.0
      %v1132 = vand.u32 %v735, 4294901760
      %1133 = vmatmul.mubr.f32.gmra.mrb[0].mxu0 %v1132
      %v1134 = vpop.f32.mrb[0].mxu0
      %v1135 = vadd.f32 %v1055, %v1134
      %v1136 = vpop.f32.mrb[0].mxu0
      %1137 = vdwg.mxu0
      %1138 = vmatprep.subr.mxu0 0.0
      %v1139 = vand.u32 %v730, 4294901760
      %1140 = vmatpush1.msra.mxu0 %v1139
      %1141 = vmatprep.subr.mxu0 0.0
      %v1142 = vand.u32 %v731, 4294901760
      %1143 = vmatpush1.msra.mxu0 %v1142
      %1144 = vmatprep.subr.mxu0 0.0
      %v1145 = vand.u32 %v738, 4294901760
      %1146 = vmatpush1.msra.mxu0 %v1145
      %1147 = vmatprep.subr.mxu0 0.0
      %1148 = vmatpush1.msra.mxu0 0.0
      %1149 = vmatprep.subr.mxu0 0.0
      %1150 = vmatpush1.msra.mxu0 0.0
      %1151 = vmatprep.subr.mxu0 0.0
      %1152 = vmatpush1.msra.mxu0 0.0
      %1153 = vmatprep.subr.mxu0 0.0
      %1154 = vmatpush1.msra.mxu0 0.0
      %1155 = vmatprep.subr.mxu0 0.0
      %1156 = vmatpush1.msra.mxu0 0.0
      %1157 = vmatprep.subr.mxu0 0.0
      %1158 = vmatpush1.msra.mxu0 0.0
      %1159 = vmatprep.subr.mxu0 0.0
      %1160 = vmatpush1.msra.mxu0 0.0
      %1161 = vmatprep.subr.mxu0 0.0
      %1162 = vmatpush1.msra.mxu0 0.0
      %1163 = vmatprep.subr.mxu0 0.0
      %1164 = vmatpush1.msra.mxu0 0.0
      %1165 = vmatprep.subr.mxu0 0.0
      %1166 = vmatpush1.msra.mxu0 0.0
      %1167 = vmatprep.subr.mxu0 0.0
      %1168 = vmatpush1.msra.mxu0 0.0
      %1169 = vmatprep.subr.mxu0 0.0
      %1170 = vmatpush1.msra.mxu0 0.0
      %1171 = vmatprep.subr.mxu0 0.0
      %1172 = vmatpush1.msra.mxu0 0.0
      %1173 = vmatprep.subr.mxu0 0.0
      %1174 = vmatpush1.msra.mxu0 0.0
      %1175 = vmatprep.subr.mxu0 0.0
      %1176 = vmatpush1.msra.mxu0 0.0
      %1177 = vmatprep.subr.mxu0 0.0
      %1178 = vmatpush1.msra.mxu0 0.0
      %1179 = vmatprep.subr.mxu0 0.0
      %1180 = vmatpush1.msra.mxu0 0.0
      %1181 = vmatprep.subr.mxu0 0.0
      %1182 = vmatpush1.msra.mxu0 0.0
      %1183 = vmatprep.subr.mxu0 0.0
      %1184 = vmatpush1.msra.mxu0 0.0
      %1185 = vmatprep.subr.mxu0 0.0
      %1186 = vmatpush1.msra.mxu0 0.0
      %1187 = vmatprep.subr.mxu0 0.0
      %1188 = vmatpush1.msra.mxu0 0.0
      %1189 = vmatprep.subr.mxu0 0.0
      %1190 = vmatpush1.msra.mxu0 0.0
      %1191 = vmatprep.subr.mxu0 0.0
      %1192 = vmatpush1.msra.mxu0 0.0
      %1193 = vmatprep.subr.mxu0 0.0
      %1194 = vmatpush1.msra.mxu0 0.0
      %1195 = vmatprep.subr.mxu0 0.0
      %1196 = vmatpush1.msra.mxu0 0.0
      %1197 = vmatprep.subr.mxu0 0.0
      %1198 = vmatpush1.msra.mxu0 0.0
      %1199 = vmatprep.subr.mxu0 0.0
      %1200 = vmatpush1.msra.mxu0 0.0
      %1201 = vmatprep.subr.mxu0 0.0
      %1202 = vmatpush1.msra.mxu0 0.0
      %1203 = vmatprep.subr.mxu0 0.0
      %1204 = vmatpush1.msra.mxu0 0.0
      %1205 = vmatprep.mubr.f32.mxu0 0.0
      %v1206 = vand.u32 %v735, 4294901760
      %1207 = vmatmul.mubr.f32.gmra.mrb[0].mxu0 %v1206
      %v1208 = vpop.f32.mrb[0].mxu0
      %v1209 = vadd.f32 %v1135, %v1208
      %v1210 = vpop.f32.mrb[0].mxu0
      %1211 = vdwg.mxu0
      %1212 = vst.msk [vmem:[#allocation2 + $0x8] sm:$0xff] %vm727, %v1209
      %s1213 = scalar_lea.vmem %s232, 48
      %v1214 = vld [vmem:[%s1213] sm:$0xff]
      %v1215 = vld [vmem:[%s1213 + $0x8] sm:$0xff]
      %v1216 = vld [vmem:[%s1213 + $0x10] sm:$0xf]
      %v1217 = vld [vmem:[%s237 + $0x10] sm:$0xff]
      %v1219 = vsel %vm247, %v1217, 0
      %v1222 = vsel %vm251, %v1216, 0
      %1224 = vmatprep.subr.mxu0 0.0
      %v1225 = vand.u32 %v1214, 4294901760
      %1226 = vmatpush1.msra.mxu0 %v1225
      %1227 = vmatprep.subr.mxu0 0.0
      %v1228 = vand.u32 %v1215, 4294901760
      %1229 = vmatpush1.msra.mxu0 %v1228
      %1230 = vmatprep.subr.mxu0 0.0
      %v1231 = vand.u32 %v1222, 4294901760
      %1232 = vmatpush1.msra.mxu0 %v1231
      %1233 = vmatprep.subr.mxu0 0.0
      %1234 = vmatpush1.msra.mxu0 0.0
      %1235 = vmatprep.subr.mxu0 0.0
      %1236 = vmatpush1.msra.mxu0 0.0
      %1237 = vmatprep.subr.mxu0 0.0
      %1238 = vmatpush1.msra.mxu0 0.0
      %1239 = vmatprep.subr.mxu0 0.0
      %1240 = vmatpush1.msra.mxu0 0.0
      %1241 = vmatprep.subr.mxu0 0.0
      %1242 = vmatpush1.msra.mxu0 0.0
      %1243 = vmatprep.subr.mxu0 0.0
      %1244 = vmatpush1.msra.mxu0 0.0
      %1245 = vmatprep.subr.mxu0 0.0
      %1246 = vmatpush1.msra.mxu0 0.0
      %1247 = vmatprep.subr.mxu0 0.0
      %1248 = vmatpush1.msra.mxu0 0.0
      %1249 = vmatprep.subr.mxu0 0.0
      %1250 = vmatpush1.msra.mxu0 0.0
      %1251 = vmatprep.subr.mxu0 0.0
      %1252 = vmatpush1.msra.mxu0 0.0
      %1253 = vmatprep.subr.mxu0 0.0
      %1254 = vmatpush1.msra.mxu0 0.0
      %1255 = vmatprep.subr.mxu0 0.0
      %1256 = vmatpush1.msra.mxu0 0.0
      %1257 = vmatprep.subr.mxu0 0.0
      %1258 = vmatpush1.msra.mxu0 0.0
      %1259 = vmatprep.subr.mxu0 0.0
      %1260 = vmatpush1.msra.mxu0 0.0
      %1261 = vmatprep.subr.mxu0 0.0
      %1262 = vmatpush1.msra.mxu0 0.0
      %1263 = vmatprep.subr.mxu0 0.0
      %1264 = vmatpush1.msra.mxu0 0.0
      %1265 = vmatprep.subr.mxu0 0.0
      %1266 = vmatpush1.msra.mxu0 0.0
      %1267 = vmatprep.subr.mxu0 0.0
      %1268 = vmatpush1.msra.mxu0 0.0
      %1269 = vmatprep.subr.mxu0 0.0
      %1270 = vmatpush1.msra.mxu0 0.0
      %1271 = vmatprep.subr.mxu0 0.0
      %1272 = vmatpush1.msra.mxu0 0.0
      %1273 = vmatprep.subr.mxu0 0.0
      %1274 = vmatpush1.msra.mxu0 0.0
      %1275 = vmatprep.subr.mxu0 0.0
      %1276 = vmatpush1.msra.mxu0 0.0
      %1277 = vmatprep.subr.mxu0 0.0
      %1278 = vmatpush1.msra.mxu0 0.0
      %1279 = vmatprep.subr.mxu0 0.0
      %1280 = vmatpush1.msra.mxu0 0.0
      %1281 = vmatprep.subr.mxu0 0.0
      %1282 = vmatpush1.msra.mxu0 0.0
      %1283 = vmatprep.subr.mxu0 0.0
      %1284 = vmatpush1.msra.mxu0 0.0
      %1285 = vmatprep.subr.mxu0 0.0
      %1286 = vmatpush1.msra.mxu0 0.0
      %1287 = vmatprep.subr.mxu0 0.0
      %1288 = vmatpush1.msra.mxu0 0.0
      %1289 = vmatprep.subr.mxu0 0.0
      %1290 = vmatpush1.msra.mxu0 0.0
      %1291 = vmatprep.mubr.f32.mxu0 0.0
      %v1292 = vand.u32 %v1219, 4294901760
      %v1293 = vsub.f32 %v1219, %v1292
      %v1294 = vand.u32 %v1293, 4294901760
      %v1295 = vsub.f32 %v1293, %v1294
      %v1296 = vand.u32 %v1295, 4294901760
      %1297 = vmatmul.mubr.f32.gmra.mrb[0].mxu0 %v1296
      %v1298 = vpop.f32.mrb[0].mxu0
      %v1299 = vadd.f32 0.0, %v1298
      %v1300 = vpop.f32.mrb[0].mxu0
      %1301 = vdwg.mxu0
      %1302 = vmatprep.subr.mxu0 0.0
      %v1303 = vand.u32 %v1214, 4294901760
      %v1304 = vsub.f32 %v1214, %v1303
      %v1305 = vand.u32 %v1304, 4294901760
      %v1306 = vsub.f32 %v1304, %v1305
      %v1307 = vand.u32 %v1306, 4294901760
      %1308 = vmatpush1.msra.mxu0 %v1307
      %1309 = vmatprep.subr.mxu0 0.0
      %v1310 = vand.u32 %v1215, 4294901760
      %v1311 = vsub.f32 %v1215, %v1310
      %v1312 = vand.u32 %v1311, 4294901760
      %v1313 = vsub.f32 %v1311, %v1312
      %v1314 = vand.u32 %v1313, 4294901760
      %1315 = vmatpush1.msra.mxu0 %v1314
      %1316 = vmatprep.subr.mxu0 0.0
      %v1317 = vand.u32 %v1222, 4294901760
      %v1318 = vsub.f32 %v1222, %v1317
      %v1319 = vand.u32 %v1318, 4294901760
      %v1320 = vsub.f32 %v1318, %v1319
      %v1321 = vand.u32 %v1320, 4294901760
      %1322 = vmatpush1.msra.mxu0 %v1321
      %1323 = vmatprep.subr.mxu0 0.0
      %1324 = vmatpush1.msra.mxu0 0.0
      %1325 = vmatprep.subr.mxu0 0.0
      %1326 = vmatpush1.msra.mxu0 0.0
      %1327 = vmatprep.subr.mxu0 0.0
      %1328 = vmatpush1.msra.mxu0 0.0
      %1329 = vmatprep.subr.mxu0 0.0
      %1330 = vmatpush1.msra.mxu0 0.0
      %1331 = vmatprep.subr.mxu0 0.0
      %1332 = vmatpush1.msra.mxu0 0.0
      %1333 = vmatprep.subr.mxu0 0.0
      %1334 = vmatpush1.msra.mxu0 0.0
      %1335 = vmatprep.subr.mxu0 0.0
      %1336 = vmatpush1.msra.mxu0 0.0
      %1337 = vmatprep.subr.mxu0 0.0
      %1338 = vmatpush1.msra.mxu0 0.0
      %1339 = vmatprep.subr.mxu0 0.0
      %1340 = vmatpush1.msra.mxu0 0.0
      %1341 = vmatprep.subr.mxu0 0.0
      %1342 = vmatpush1.msra.mxu0 0.0
      %1343 = vmatprep.subr.mxu0 0.0
      %1344 = vmatpush1.msra.mxu0 0.0
      %1345 = vmatprep.subr.mxu0 0.0
      %1346 = vmatpush1.msra.mxu0 0.0
      %1347 = vmatprep.subr.mxu0 0.0
      %1348 = vmatpush1.msra.mxu0 0.0
      %1349 = vmatprep.subr.mxu0 0.0
      %1350 = vmatpush1.msra.mxu0 0.0
      %1351 = vmatprep.subr.mxu0 0.0
      %1352 = vmatpush1.msra.mxu0 0.0
      %1353 = vmatprep.subr.mxu0 0.0
      %1354 = vmatpush1.msra.mxu0 0.0
      %1355 = vmatprep.subr.mxu0 0.0
      %1356 = vmatpush1.msra.mxu0 0.0
      %1357 = vmatprep.subr.mxu0 0.0
      %1358 = vmatpush1.msra.mxu0 0.0
      %1359 = vmatprep.subr.mxu0 0.0
      %1360 = vmatpush1.msra.mxu0 0.0
      %1361 = vmatprep.subr.mxu0 0.0
      %1362 = vmatpush1.msra.mxu0 0.0
      %1363 = vmatprep.subr.mxu0 0.0
      %1364 = vmatpush1.msra.mxu0 0.0
      %1365 = vmatprep.subr.mxu0 0.0
      %1366 = vmatpush1.msra.mxu0 0.0
      %1367 = vmatprep.subr.mxu0 0.0
      %1368 = vmatpush1.msra.mxu0 0.0
      %1369 = vmatprep.subr.mxu0 0.0
      %1370 = vmatpush1.msra.mxu0 0.0
      %1371 = vmatprep.subr.mxu0 0.0
      %1372 = vmatpush1.msra.mxu0 0.0
      %1373 = vmatprep.subr.mxu0 0.0
      %1374 = vmatpush1.msra.mxu0 0.0
      %1375 = vmatprep.subr.mxu0 0.0
      %1376 = vmatpush1.msra.mxu0 0.0
      %1377 = vmatprep.subr.mxu0 0.0
      %1378 = vmatpush1.msra.mxu0 0.0
      %1379 = vmatprep.subr.mxu0 0.0
      %1380 = vmatpush1.msra.mxu0 0.0
      %1381 = vmatprep.mubr.f32.mxu0 0.0
      %v1382 = vand.u32 %v1219, 4294901760
      %1383 = vmatmul.mubr.f32.gmra.mrb[0].mxu0 %v1382
      %v1384 = vpop.f32.mrb[0].mxu0
      %v1385 = vadd.f32 %v1299, %v1384
      %v1386 = vpop.f32.mrb[0].mxu0
      %1387 = vdwg.mxu0
      %1388 = vmatprep.subr.mxu0 0.0
      %v1389 = vand.u32 %v1214, 4294901760
      %v1390 = vsub.f32 %v1214, %v1389
      %1391 = vmatpush1.msra.mxu0 %v1390
      %1392 = vmatprep.subr.mxu0 0.0
      %v1393 = vand.u32 %v1215, 4294901760
      %v1394 = vsub.f32 %v1215, %v1393
      %1395 = vmatpush1.msra.mxu0 %v1394
      %1396 = vmatprep.subr.mxu0 0.0
      %v1397 = vand.u32 %v1222, 4294901760
      %v1398 = vsub.f32 %v1222, %v1397
      %1399 = vmatpush1.msra.mxu0 %v1398
      %1400 = vmatprep.subr.mxu0 0.0
      %1401 = vmatpush1.msra.mxu0 0.0
      %1402 = vmatprep.subr.mxu0 0.0
      %1403 = vmatpush1.msra.mxu0 0.0
      %1404 = vmatprep.subr.mxu0 0.0
      %1405 = vmatpush1.msra.mxu0 0.0
      %1406 = vmatprep.subr.mxu0 0.0
      %1407 = vmatpush1.msra.mxu0 0.0
      %1408 = vmatprep.subr.mxu0 0.0
      %1409 = vmatpush1.msra.mxu0 0.0
      %1410 = vmatprep.subr.mxu0 0.0
      %1411 = vmatpush1.msra.mxu0 0.0
      %1412 = vmatprep.subr.mxu0 0.0
      %1413 = vmatpush1.msra.mxu0 0.0
      %1414 = vmatprep.subr.mxu0 0.0
      %1415 = vmatpush1.msra.mxu0 0.0
      %1416 = vmatprep.subr.mxu0 0.0
      %1417 = vmatpush1.msra.mxu0 0.0
      %1418 = vmatprep.subr.mxu0 0.0
      %1419 = vmatpush1.msra.mxu0 0.0
      %1420 = vmatprep.subr.mxu0 0.0
      %1421 = vmatpush1.msra.mxu0 0.0
      %1422 = vmatprep.subr.mxu0 0.0
      %1423 = vmatpush1.msra.mxu0 0.0
      %1424 = vmatprep.subr.mxu0 0.0
      %1425 = vmatpush1.msra.mxu0 0.0
      %1426 = vmatprep.subr.mxu0 0.0
      %1427 = vmatpush1.msra.mxu0 0.0
      %1428 = vmatprep.subr.mxu0 0.0
      %1429 = vmatpush1.msra.mxu0 0.0
      %1430 = vmatprep.subr.mxu0 0.0
      %1431 = vmatpush1.msra.mxu0 0.0
      %1432 = vmatprep.subr.mxu0 0.0
      %1433 = vmatpush1.msra.mxu0 0.0
      %1434 = vmatprep.subr.mxu0 0.0
      %1435 = vmatpush1.msra.mxu0 0.0
      %1436 = vmatprep.subr.mxu0 0.0
      %1437 = vmatpush1.msra.mxu0 0.0
      %1438 = vmatprep.subr.mxu0 0.0
      %1439 = vmatpush1.msra.mxu0 0.0
      %1440 = vmatprep.subr.mxu0 0.0
      %1441 = vmatpush1.msra.mxu0 0.0
      %1442 = vmatprep.subr.mxu0 0.0
      %1443 = vmatpush1.msra.mxu0 0.0
      %1444 = vmatprep.subr.mxu0 0.0
      %1445 = vmatpush1.msra.mxu0 0.0
      %1446 = vmatprep.subr.mxu0 0.0
      %1447 = vmatpush1.msra.mxu0 0.0
      %1448 = vmatprep.subr.mxu0 0.0
      %1449 = vmatpush1.msra.mxu0 0.0
      %1450 = vmatprep.subr.mxu0 0.0
      %1451 = vmatpush1.msra.mxu0 0.0
      %1452 = vmatprep.subr.mxu0 0.0
      %1453 = vmatpush1.msra.mxu0 0.0
      %1454 = vmatprep.subr.mxu0 0.0
      %1455 = vmatpush1.msra.mxu0 0.0
      %1456 = vmatprep.subr.mxu0 0.0
      %1457 = vmatpush1.msra.mxu0 0.0
      %1458 = vmatprep.mubr.f32.mxu0 0.0
      %v1459 = vand.u32 %v1219, 4294901760
      %v1460 = vsub.f32 %v1219, %v1459
      %1461 = vmatmul.mubr.f32.gmra.mrb[0].mxu0 %v1460
      %v1462 = vpop.f32.mrb[0].mxu0
      %v1463 = vadd.f32 %v1385, %v1462
      %v1464 = vpop.f32.mrb[0].mxu0
      %1465 = vdwg.mxu0
      %1466 = vmatprep.subr.mxu0 0.0
      %v1467 = vand.u32 %v1214, 4294901760
      %1468 = vmatpush1.msra.mxu0 %v1467
      %1469 = vmatprep.subr.mxu0 0.0
      %v1470 = vand.u32 %v1215, 4294901760
      %1471 = vmatpush1.msra.mxu0 %v1470
      %1472 = vmatprep.subr.mxu0 0.0
      %v1473 = vand.u32 %v1222, 4294901760
      %1474 = vmatpush1.msra.mxu0 %v1473
      %1475 = vmatprep.subr.mxu0 0.0
      %1476 = vmatpush1.msra.mxu0 0.0
      %1477 = vmatprep.subr.mxu0 0.0
      %1478 = vmatpush1.msra.mxu0 0.0
      %1479 = vmatprep.subr.mxu0 0.0
      %1480 = vmatpush1.msra.mxu0 0.0
      %1481 = vmatprep.subr.mxu0 0.0
      %1482 = vmatpush1.msra.mxu0 0.0
      %1483 = vmatprep.subr.mxu0 0.0
      %1484 = vmatpush1.msra.mxu0 0.0
      %1485 = vmatprep.subr.mxu0 0.0
      %1486 = vmatpush1.msra.mxu0 0.0
      %1487 = vmatprep.subr.mxu0 0.0
      %1488 = vmatpush1.msra.mxu0 0.0
      %1489 = vmatprep.subr.mxu0 0.0
      %1490 = vmatpush1.msra.mxu0 0.0
      %1491 = vmatprep.subr.mxu0 0.0
      %1492 = vmatpush1.msra.mxu0 0.0
      %1493 = vmatprep.subr.mxu0 0.0
      %1494 = vmatpush1.msra.mxu0 0.0
      %1495 = vmatprep.subr.mxu0 0.0
      %1496 = vmatpush1.msra.mxu0 0.0
      %1497 = vmatprep.subr.mxu0 0.0
      %1498 = vmatpush1.msra.mxu0 0.0
      %1499 = vmatprep.subr.mxu0 0.0
      %1500 = vmatpush1.msra.mxu0 0.0
      %1501 = vmatprep.subr.mxu0 0.0
      %1502 = vmatpush1.msra.mxu0 0.0
      %1503 = vmatprep.subr.mxu0 0.0
      %1504 = vmatpush1.msra.mxu0 0.0
      %1505 = vmatprep.subr.mxu0 0.0
      %1506 = vmatpush1.msra.mxu0 0.0
      %1507 = vmatprep.subr.mxu0 0.0
      %1508 = vmatpush1.msra.mxu0 0.0
      %1509 = vmatprep.subr.mxu0 0.0
      %1510 = vmatpush1.msra.mxu0 0.0
      %1511 = vmatprep.subr.mxu0 0.0
      %1512 = vmatpush1.msra.mxu0 0.0
      %1513 = vmatprep.subr.mxu0 0.0
      %1514 = vmatpush1.msra.mxu0 0.0
      %1515 = vmatprep.subr.mxu0 0.0
      %1516 = vmatpush1.msra.mxu0 0.0
      %1517 = vmatprep.subr.mxu0 0.0
      %1518 = vmatpush1.msra.mxu0 0.0
      %1519 = vmatprep.subr.mxu0 0.0
      %1520 = vmatpush1.msra.mxu0 0.0
      %1521 = vmatprep.subr.mxu0 0.0
      %1522 = vmatpush1.msra.mxu0 0.0
      %1523 = vmatprep.subr.mxu0 0.0
      %1524 = vmatpush1.msra.mxu0 0.0
      %1525 = vmatprep.subr.mxu0 0.0
      %1526 = vmatpush1.msra.mxu0 0.0
      %1527 = vmatprep.subr.mxu0 0.0
      %1528 = vmatpush1.msra.mxu0 0.0
      %1529 = vmatprep.subr.mxu0 0.0
      %1530 = vmatpush1.msra.mxu0 0.0
      %1531 = vmatprep.subr.mxu0 0.0
      %1532 = vmatpush1.msra.mxu0 0.0
      %1533 = vmatprep.mubr.f32.mxu0 0.0
      %v1534 = vand.u32 %v1219, 4294901760
      %v1535 = vsub.f32 %v1219, %v1534
      %v1536 = vand.u32 %v1535, 4294901760
      %1537 = vmatmul.mubr.f32.gmra.mrb[0].mxu0 %v1536
      %v1538 = vpop.f32.mrb[0].mxu0
      %v1539 = vadd.f32 %v1463, %v1538
      %v1540 = vpop.f32.mrb[0].mxu0
      %1541 = vdwg.mxu0
      %1542 = vmatprep.subr.mxu0 0.0
      %v1543 = vand.u32 %v1214, 4294901760
      %v1544 = vsub.f32 %v1214, %v1543
      %v1545 = vand.u32 %v1544, 4294901760
      %1546 = vmatpush1.msra.mxu0 %v1545
      %1547 = vmatprep.subr.mxu0 0.0
      %v1548 = vand.u32 %v1215, 4294901760
      %v1549 = vsub.f32 %v1215, %v1548
      %v1550 = vand.u32 %v1549, 4294901760
      %1551 = vmatpush1.msra.mxu0 %v1550
      %1552 = vmatprep.subr.mxu0 0.0
      %v1553 = vand.u32 %v1222, 4294901760
      %v1554 = vsub.f32 %v1222, %v1553
      %v1555 = vand.u32 %v1554, 4294901760
      %1556 = vmatpush1.msra.mxu0 %v1555
      %1557 = vmatprep.subr.mxu0 0.0
      %1558 = vmatpush1.msra.mxu0 0.0
      %1559 = vmatprep.subr.mxu0 0.0
      %1560 = vmatpush1.msra.mxu0 0.0
      %1561 = vmatprep.subr.mxu0 0.0
      %1562 = vmatpush1.msra.mxu0 0.0
      %1563 = vmatprep.subr.mxu0 0.0
      %1564 = vmatpush1.msra.mxu0 0.0
      %1565 = vmatprep.subr.mxu0 0.0
      %1566 = vmatpush1.msra.mxu0 0.0
      %1567 = vmatprep.subr.mxu0 0.0
      %1568 = vmatpush1.msra.mxu0 0.0
      %1569 = vmatprep.subr.mxu0 0.0
      %1570 = vmatpush1.msra.mxu0 0.0
      %1571 = vmatprep.subr.mxu0 0.0
      %1572 = vmatpush1.msra.mxu0 0.0
      %1573 = vmatprep.subr.mxu0 0.0
      %1574 = vmatpush1.msra.mxu0 0.0
      %1575 = vmatprep.subr.mxu0 0.0
      %1576 = vmatpush1.msra.mxu0 0.0
      %1577 = vmatprep.subr.mxu0 0.0
      %1578 = vmatpush1.msra.mxu0 0.0
      %1579 = vmatprep.subr.mxu0 0.0
      %1580 = vmatpush1.msra.mxu0 0.0
      %1581 = vmatprep.subr.mxu0 0.0
      %1582 = vmatpush1.msra.mxu0 0.0
      %1583 = vmatprep.subr.mxu0 0.0
      %1584 = vmatpush1.msra.mxu0 0.0
      %1585 = vmatprep.subr.mxu0 0.0
      %1586 = vmatpush1.msra.mxu0 0.0
      %1587 = vmatprep.subr.mxu0 0.0
      %1588 = vmatpush1.msra.mxu0 0.0
      %1589 = vmatprep.subr.mxu0 0.0
      %1590 = vmatpush1.msra.mxu0 0.0
      %1591 = vmatprep.subr.mxu0 0.0
      %1592 = vmatpush1.msra.mxu0 0.0
      %1593 = vmatprep.subr.mxu0 0.0
      %1594 = vmatpush1.msra.mxu0 0.0
      %1595 = vmatprep.subr.mxu0 0.0
      %1596 = vmatpush1.msra.mxu0 0.0
      %1597 = vmatprep.subr.mxu0 0.0
      %1598 = vmatpush1.msra.mxu0 0.0
      %1599 = vmatprep.subr.mxu0 0.0
      %1600 = vmatpush1.msra.mxu0 0.0
      %1601 = vmatprep.subr.mxu0 0.0
      %1602 = vmatpush1.msra.mxu0 0.0
      %1603 = vmatprep.subr.mxu0 0.0
      %1604 = vmatpush1.msra.mxu0 0.0
      %1605 = vmatprep.subr.mxu0 0.0
      %1606 = vmatpush1.msra.mxu0 0.0
      %1607 = vmatprep.subr.mxu0 0.0
      %1608 = vmatpush1.msra.mxu0 0.0
      %1609 = vmatprep.subr.mxu0 0.0
      %1610 = vmatpush1.msra.mxu0 0.0
      %1611 = vmatprep.subr.mxu0 0.0
      %1612 = vmatpush1.msra.mxu0 0.0
      %1613 = vmatprep.subr.mxu0 0.0
      %1614 = vmatpush1.msra.mxu0 0.0
      %1615 = vmatprep.mubr.f32.mxu0 0.0
      %v1616 = vand.u32 %v1219, 4294901760
      %1617 = vmatmul.mubr.f32.gmra.mrb[0].mxu0 %v1616
      %v1618 = vpop.f32.mrb[0].mxu0
      %v1619 = vadd.f32 %v1539, %v1618
      %v1620 = vpop.f32.mrb[0].mxu0
      %1621 = vdwg.mxu0
      %1622 = vmatprep.subr.mxu0 0.0
      %v1623 = vand.u32 %v1214, 4294901760
      %1624 = vmatpush1.msra.mxu0 %v1623
      %1625 = vmatprep.subr.mxu0 0.0
      %v1626 = vand.u32 %v1215, 4294901760
      %1627 = vmatpush1.msra.mxu0 %v1626
      %1628 = vmatprep.subr.mxu0 0.0
      %v1629 = vand.u32 %v1222, 4294901760
      %1630 = vmatpush1.msra.mxu0 %v1629
      %1631 = vmatprep.subr.mxu0 0.0
      %1632 = vmatpush1.msra.mxu0 0.0
      %1633 = vmatprep.subr.mxu0 0.0
      %1634 = vmatpush1.msra.mxu0 0.0
      %1635 = vmatprep.subr.mxu0 0.0
      %1636 = vmatpush1.msra.mxu0 0.0
      %1637 = vmatprep.subr.mxu0 0.0
      %1638 = vmatpush1.msra.mxu0 0.0
      %1639 = vmatprep.subr.mxu0 0.0
      %1640 = vmatpush1.msra.mxu0 0.0
      %1641 = vmatprep.subr.mxu0 0.0
      %1642 = vmatpush1.msra.mxu0 0.0
      %1643 = vmatprep.subr.mxu0 0.0
      %1644 = vmatpush1.msra.mxu0 0.0
      %1645 = vmatprep.subr.mxu0 0.0
      %1646 = vmatpush1.msra.mxu0 0.0
      %1647 = vmatprep.subr.mxu0 0.0
      %1648 = vmatpush1.msra.mxu0 0.0
      %1649 = vmatprep.subr.mxu0 0.0
      %1650 = vmatpush1.msra.mxu0 0.0
      %1651 = vmatprep.subr.mxu0 0.0
      %1652 = vmatpush1.msra.mxu0 0.0
      %1653 = vmatprep.subr.mxu0 0.0
      %1654 = vmatpush1.msra.mxu0 0.0
      %1655 = vmatprep.subr.mxu0 0.0
      %1656 = vmatpush1.msra.mxu0 0.0
      %1657 = vmatprep.subr.mxu0 0.0
      %1658 = vmatpush1.msra.mxu0 0.0
      %1659 = vmatprep.subr.mxu0 0.0
      %1660 = vmatpush1.msra.mxu0 0.0
      %1661 = vmatprep.subr.mxu0 0.0
      %1662 = vmatpush1.msra.mxu0 0.0
      %1663 = vmatprep.subr.mxu0 0.0
      %1664 = vmatpush1.msra.mxu0 0.0
      %1665 = vmatprep.subr.mxu0 0.0
      %1666 = vmatpush1.msra.mxu0 0.0
      %1667 = vmatprep.subr.mxu0 0.0
      %1668 = vmatpush1.msra.mxu0 0.0
      %1669 = vmatprep.subr.mxu0 0.0
      %1670 = vmatpush1.msra.mxu0 0.0
      %1671 = vmatprep.subr.mxu0 0.0
      %1672 = vmatpush1.msra.mxu0 0.0
      %1673 = vmatprep.subr.mxu0 0.0
      %1674 = vmatpush1.msra.mxu0 0.0
      %1675 = vmatprep.subr.mxu0 0.0
      %1676 = vmatpush1.msra.mxu0 0.0
      %1677 = vmatprep.subr.mxu0 0.0
      %1678 = vmatpush1.msra.mxu0 0.0
      %1679 = vmatprep.subr.mxu0 0.0
      %1680 = vmatpush1.msra.mxu0 0.0
      %1681 = vmatprep.subr.mxu0 0.0
      %1682 = vmatpush1.msra.mxu0 0.0
      %1683 = vmatprep.subr.mxu0 0.0
      %1684 = vmatpush1.msra.mxu0 0.0
      %1685 = vmatprep.subr.mxu0 0.0
      %1686 = vmatpush1.msra.mxu0 0.0
      %1687 = vmatprep.subr.mxu0 0.0
      %1688 = vmatpush1.msra.mxu0 0.0
      %1689 = vmatprep.mubr.f32.mxu0 0.0
      %v1690 = vand.u32 %v1219, 4294901760
      %1691 = vmatmul.mubr.f32.gmra.mrb[0].mxu0 %v1690
      %v1692 = vpop.f32.mrb[0].mxu0
      %v1693 = vadd.f32 %v1619, %v1692
      %v1694 = vpop.f32.mrb[0].mxu0
      %1695 = vdwg.mxu0
      %1696 = vst.msk [vmem:[#allocation2 + $0x10] sm:$0xff] %vm727, %v1693
      %v1697 = vld [vmem:[#allocation2] sm:$0xff]
      %v1698 = vld [vmem:[#allocation2 + $0x8] sm:$0xff]
      %v1699 = vld [vmem:[#allocation2 + $0x10] sm:$0xff]
      %v1700 = vld [vmem:[%s2] sm:$0xff]
      %v1701 = vld [vmem:[%s2 + $0x8] sm:$0xff]
      %v1702 = vld [vmem:[%s2 + $0x10] sm:$0xff]
      %v1703 = vld [vmem:[%s3] sm:$0xff]
      %v1704 = vld [vmem:[%s3 + $0x8] sm:$0xff]
      %v1705 = vld [vmem:[%s3 + $0x10] sm:$0xff]
      %1707 = vset.pattern.permute.xlu0 0
      %1708 = vperm.xlu0 %1707, %v1703
      %v1709 = vpop.permute.xlu0 %1708
      %1712 = vset.pattern.permute.xlu0 0
      %1713 = vperm.xlu0 %1712, %v1704
      %v1714 = vpop.permute.xlu0 %1713
      %1717 = vset.pattern.permute.xlu0 0
      %1718 = vperm.xlu0 %1717, %v1705
      %v1719 = vpop.permute.xlu0 %1718
      %v1722 = vsel %vm727, %v1697, 0
      %v1725 = vsel %vm727, %v1698, 0
      %v1728 = vsel %vm727, %v1699, 0
      %1730 = vmatprep.subr.mxu0 0.0
      %v1731 = vand.u32 %v1700, 4294901760
      %1732 = vmatpush1.msra.mxu0 %v1731
      %1733 = vmatprep.subr.mxu0 0.0
      %v1734 = vand.u32 %v1701, 4294901760
      %1735 = vmatpush1.msra.mxu0 %v1734
      %1736 = vmatprep.subr.mxu0 0.0
      %v1737 = vand.u32 %v1702, 4294901760
      %1738 = vmatpush1.msra.mxu0 %v1737
      %1739 = vmatprep.subr.mxu0 0.0
      %1740 = vmatpush1.msra.mxu0 0.0
      %1741 = vmatprep.subr.mxu0 0.0
      %1742 = vmatpush1.msra.mxu0 0.0
      %1743 = vmatprep.subr.mxu0 0.0
      %1744 = vmatpush1.msra.mxu0 0.0
      %1745 = vmatprep.subr.mxu0 0.0
      %1746 = vmatpush1.msra.mxu0 0.0
      %1747 = vmatprep.subr.mxu0 0.0
      %1748 = vmatpush1.msra.mxu0 0.0
      %1749 = vmatprep.subr.mxu0 0.0
      %1750 = vmatpush1.msra.mxu0 0.0
      %1751 = vmatprep.subr.mxu0 0.0
      %1752 = vmatpush1.msra.mxu0 0.0
      %1753 = vmatprep.subr.mxu0 0.0
      %1754 = vmatpush1.msra.mxu0 0.0
      %1755 = vmatprep.subr.mxu0 0.0
      %1756 = vmatpush1.msra.mxu0 0.0
      %1757 = vmatprep.subr.mxu0 0.0
      %1758 = vmatpush1.msra.mxu0 0.0
      %1759 = vmatprep.subr.mxu0 0.0
      %1760 = vmatpush1.msra.mxu0 0.0
      %1761 = vmatprep.subr.mxu0 0.0
      %1762 = vmatpush1.msra.mxu0 0.0
      %1763 = vmatprep.subr.mxu0 0.0
      %1764 = vmatpush1.msra.mxu0 0.0
      %1765 = vmatprep.subr.mxu0 0.0
      %1766 = vmatpush1.msra.mxu0 0.0
      %1767 = vmatprep.subr.mxu0 0.0
      %1768 = vmatpush1.msra.mxu0 0.0
      %1769 = vmatprep.subr.mxu0 0.0
      %1770 = vmatpush1.msra.mxu0 0.0
      %1771 = vmatprep.subr.mxu0 0.0
      %1772 = vmatpush1.msra.mxu0 0.0
      %1773 = vmatprep.subr.mxu0 0.0
      %1774 = vmatpush1.msra.mxu0 0.0
      %1775 = vmatprep.subr.mxu0 0.0
      %1776 = vmatpush1.msra.mxu0 0.0
      %1777 = vmatprep.subr.mxu0 0.0
      %1778 = vmatpush1.msra.mxu0 0.0
      %1779 = vmatprep.subr.mxu0 0.0
      %1780 = vmatpush1.msra.mxu0 0.0
      %1781 = vmatprep.subr.mxu0 0.0
      %1782 = vmatpush1.msra.mxu0 0.0
      %1783 = vmatprep.subr.mxu0 0.0
      %1784 = vmatpush1.msra.mxu0 0.0
      %1785 = vmatprep.subr.mxu0 0.0
      %1786 = vmatpush1.msra.mxu0 0.0
      %1787 = vmatprep.subr.mxu0 0.0
      %1788 = vmatpush1.msra.mxu0 0.0
      %1789 = vmatprep.subr.mxu0 0.0
      %1790 = vmatpush1.msra.mxu0 0.0
      %1791 = vmatprep.subr.mxu0 0.0
      %1792 = vmatpush1.msra.mxu0 0.0
      %1793 = vmatprep.subr.mxu0 0.0
      %1794 = vmatpush1.msra.mxu0 0.0
      %1795 = vmatprep.subr.mxu0 0.0
      %1796 = vmatpush1.msra.mxu0 0.0
      %1797 = vmatprep.mubr.f32.mxu0 0.0
      %v1798 = vand.u32 %v1722, 4294901760
      %v1799 = vsub.f32 %v1722, %v1798
      %v1800 = vand.u32 %v1799, 4294901760
      %v1801 = vsub.f32 %v1799, %v1800
      %v1802 = vand.u32 %v1801, 4294901760
      %1803 = vmatmul.mubr.f32.gmra.mrb[0].mxu0 %v1802
      %v1804 = vpop.f32.mrb[0].mxu0
      %v1805 = vadd.f32 %v1709, %v1804
      %v1806 = vpop.f32.mrb[0].mxu0
      %1807 = vmatprep.mubr.f32.mxu0 0.0
      %v1808 = vand.u32 %v1725, 4294901760
      %v1809 = vsub.f32 %v1725, %v1808
      %v1810 = vand.u32 %v1809, 4294901760
      %v1811 = vsub.f32 %v1809, %v1810
      %v1812 = vand.u32 %v1811, 4294901760
      %1813 = vmatmul.mubr.f32.gmra.mrb[0].mxu0 %v1812
      %v1814 = vpop.f32.mrb[0].mxu0
      %v1815 = vadd.f32 %v1714, %v1814
      %v1816 = vpop.f32.mrb[0].mxu0
      %1817 = vmatprep.mubr.f32.mxu0 0.0
      %v1818 = vand.u32 %v1728, 4294901760
      %v1819 = vsub.f32 %v1728, %v1818
      %v1820 = vand.u32 %v1819, 4294901760
      %v1821 = vsub.f32 %v1819, %v1820
      %v1822 = vand.u32 %v1821, 4294901760
      %1823 = vmatmul.mubr.f32.gmra.mrb[0].mxu0 %v1822
      %v1824 = vpop.f32.mrb[0].mxu0
      %v1825 = vadd.f32 %v1719, %v1824
      %v1826 = vpop.f32.mrb[0].mxu0
      %1827 = vdwg.mxu0
      %1828 = vmatprep.subr.mxu0 0.0
      %v1829 = vand.u32 %v1700, 4294901760
      %v1830 = vsub.f32 %v1700, %v1829
      %v1831 = vand.u32 %v1830, 4294901760
      %v1832 = vsub.f32 %v1830, %v1831
      %v1833 = vand.u32 %v1832, 4294901760
      %1834 = vmatpush1.msra.mxu0 %v1833
      %1835 = vmatprep.subr.mxu0 0.0
      %v1836 = vand.u32 %v1701, 4294901760
      %v1837 = vsub.f32 %v1701, %v1836
      %v1838 = vand.u32 %v1837, 4294901760
      %v1839 = vsub.f32 %v1837, %v1838
      %v1840 = vand.u32 %v1839, 4294901760
      %1841 = vmatpush1.msra.mxu0 %v1840
      %1842 = vmatprep.subr.mxu0 0.0
      %v1843 = vand.u32 %v1702, 4294901760
      %v1844 = vsub.f32 %v1702, %v1843
      %v1845 = vand.u32 %v1844, 4294901760
      %v1846 = vsub.f32 %v1844, %v1845
      %v1847 = vand.u32 %v1846, 4294901760
      %1848 = vmatpush1.msra.mxu0 %v1847
      %1849 = vmatprep.subr.mxu0 0.0
      %1850 = vmatpush1.msra.mxu0 0.0
      %1851 = vmatprep.subr.mxu0 0.0
      %1852 = vmatpush1.msra.mxu0 0.0
      %1853 = vmatprep.subr.mxu0 0.0
      %1854 = vmatpush1.msra.mxu0 0.0
      %1855 = vmatprep.subr.mxu0 0.0
      %1856 = vmatpush1.msra.mxu0 0.0
      %1857 = vmatprep.subr.mxu0 0.0
      %1858 = vmatpush1.msra.mxu0 0.0
      %1859 = vmatprep.subr.mxu0 0.0
      %1860 = vmatpush1.msra.mxu0 0.0
      %1861 = vmatprep.subr.mxu0 0.0
      %1862 = vmatpush1.msra.mxu0 0.0
      %1863 = vmatprep.subr.mxu0 0.0
      %1864 = vmatpush1.msra.mxu0 0.0
      %1865 = vmatprep.subr.mxu0 0.0
      %1866 = vmatpush1.msra.mxu0 0.0
      %1867 = vmatprep.subr.mxu0 0.0
      %1868 = vmatpush1.msra.mxu0 0.0
      %1869 = vmatprep.subr.mxu0 0.0
      %1870 = vmatpush1.msra.mxu0 0.0
      %1871 = vmatprep.subr.mxu0 0.0
      %1872 = vmatpush1.msra.mxu0 0.0
      %1873 = vmatprep.subr.mxu0 0.0
      %1874 = vmatpush1.msra.mxu0 0.0
      %1875 = vmatprep.subr.mxu0 0.0
      %1876 = vmatpush1.msra.mxu0 0.0
      %1877 = vmatprep.subr.mxu0 0.0
      %1878 = vmatpush1.msra.mxu0 0.0
      %1879 = vmatprep.subr.mxu0 0.0
      %1880 = vmatpush1.msra.mxu0 0.0
      %1881 = vmatprep.subr.mxu0 0.0
      %1882 = vmatpush1.msra.mxu0 0.0
      %1883 = vmatprep.subr.mxu0 0.0
      %1884 = vmatpush1.msra.mxu0 0.0
      %1885 = vmatprep.subr.mxu0 0.0
      %1886 = vmatpush1.msra.mxu0 0.0
      %1887 = vmatprep.subr.mxu0 0.0
      %1888 = vmatpush1.msra.mxu0 0.0
      %1889 = vmatprep.subr.mxu0 0.0
      %1890 = vmatpush1.msra.mxu0 0.0
      %1891 = vmatprep.subr.mxu0 0.0
      %1892 = vmatpush1.msra.mxu0 0.0
      %1893 = vmatprep.subr.mxu0 0.0
      %1894 = vmatpush1.msra.mxu0 0.0
      %1895 = vmatprep.subr.mxu0 0.0
      %1896 = vmatpush1.msra.mxu0 0.0
      %1897 = vmatprep.subr.mxu0 0.0
      %1898 = vmatpush1.msra.mxu0 0.0
      %1899 = vmatprep.subr.mxu0 0.0
      %1900 = vmatpush1.msra.mxu0 0.0
      %1901 = vmatprep.subr.mxu0 0.0
      %1902 = vmatpush1.msra.mxu0 0.0
      %1903 = vmatprep.subr.mxu0 0.0
      %1904 = vmatpush1.msra.mxu0 0.0
      %1905 = vmatprep.subr.mxu0 0.0
      %1906 = vmatpush1.msra.mxu0 0.0
      %1907 = vmatprep.mubr.f32.mxu0 0.0
      %v1908 = vand.u32 %v1722, 4294901760
      %1909 = vmatmul.mubr.f32.gmra.mrb[0].mxu0 %v1908
      %v1910 = vpop.f32.mrb[0].mxu0
      %v1911 = vadd.f32 %v1805, %v1910
      %v1912 = vpop.f32.mrb[0].mxu0
      %1913 = vmatprep.mubr.f32.mxu0 0.0
      %v1914 = vand.u32 %v1725, 4294901760
      %1915 = vmatmul.mubr.f32.gmra.mrb[0].mxu0 %v1914
      %v1916 = vpop.f32.mrb[0].mxu0
      %v1917 = vadd.f32 %v1815, %v1916
      %v1918 = vpop.f32.mrb[0].mxu0
      %1919 = vmatprep.mubr.f32.mxu0 0.0
      %v1920 = vand.u32 %v1728, 4294901760
      %1921 = vmatmul.mubr.f32.gmra.mrb[0].mxu0 %v1920
      %v1922 = vpop.f32.mrb[0].mxu0
      %v1923 = vadd.f32 %v1825, %v1922
      %v1924 = vpop.f32.mrb[0].mxu0
      %1925 = vdwg.mxu0
      %1926 = vmatprep.subr.mxu0 0.0
      %v1927 = vand.u32 %v1700, 4294901760
      %v1928 = vsub.f32 %v1700, %v1927
      %1929 = vmatpush1.msra.mxu0 %v1928
      %1930 = vmatprep.subr.mxu0 0.0
      %v1931 = vand.u32 %v1701, 4294901760
      %v1932 = vsub.f32 %v1701, %v1931
      %1933 = vmatpush1.msra.mxu0 %v1932
      %1934 = vmatprep.subr.mxu0 0.0
      %v1935 = vand.u32 %v1702, 4294901760
      %v1936 = vsub.f32 %v1702, %v1935
      %1937 = vmatpush1.msra.mxu0 %v1936
      %1938 = vmatprep.subr.mxu0 0.0
      %1939 = vmatpush1.msra.mxu0 0.0
      %1940 = vmatprep.subr.mxu0 0.0
      %1941 = vmatpush1.msra.mxu0 0.0
      %1942 = vmatprep.subr.mxu0 0.0
      %1943 = vmatpush1.msra.mxu0 0.0
      %1944 = vmatprep.subr.mxu0 0.0
      %1945 = vmatpush1.msra.mxu0 0.0
      %1946 = vmatprep.subr.mxu0 0.0
      %1947 = vmatpush1.msra.mxu0 0.0
      %1948 = vmatprep.subr.mxu0 0.0
      %1949 = vmatpush1.msra.mxu0 0.0
      %1950 = vmatprep.subr.mxu0 0.0
      %1951 = vmatpush1.msra.mxu0 0.0
      %1952 = vmatprep.subr.mxu0 0.0
      %1953 = vmatpush1.msra.mxu0 0.0
      %1954 = vmatprep.subr.mxu0 0.0
      %1955 = vmatpush1.msra.mxu0 0.0
      %1956 = vmatprep.subr.mxu0 0.0
      %1957 = vmatpush1.msra.mxu0 0.0
      %1958 = vmatprep.subr.mxu0 0.0
      %1959 = vmatpush1.msra.mxu0 0.0
      %1960 = vmatprep.subr.mxu0 0.0
      %1961 = vmatpush1.msra.mxu0 0.0
      %1962 = vmatprep.subr.mxu0 0.0
      %1963 = vmatpush1.msra.mxu0 0.0
      %1964 = vmatprep.subr.mxu0 0.0
      %1965 = vmatpush1.msra.mxu0 0.0
      %1966 = vmatprep.subr.mxu0 0.0
      %1967 = vmatpush1.msra.mxu0 0.0
      %1968 = vmatprep.subr.mxu0 0.0
      %1969 = vmatpush1.msra.mxu0 0.0
      %1970 = vmatprep.subr.mxu0 0.0
      %1971 = vmatpush1.msra.mxu0 0.0
      %1972 = vmatprep.subr.mxu0 0.0
      %1973 = vmatpush1.msra.mxu0 0.0
      %1974 = vmatprep.subr.mxu0 0.0
      %1975 = vmatpush1.msra.mxu0 0.0
      %1976 = vmatprep.subr.mxu0 0.0
      %1977 = vmatpush1.msra.mxu0 0.0
      %1978 = vmatprep.subr.mxu0 0.0
      %1979 = vmatpush1.msra.mxu0 0.0
      %1980 = vmatprep.subr.mxu0 0.0
      %1981 = vmatpush1.msra.mxu0 0.0
      %1982 = vmatprep.subr.mxu0 0.0
      %1983 = vmatpush1.msra.mxu0 0.0
      %1984 = vmatprep.subr.mxu0 0.0
      %1985 = vmatpush1.msra.mxu0 0.0
      %1986 = vmatprep.subr.mxu0 0.0
      %1987 = vmatpush1.msra.mxu0 0.0
      %1988 = vmatprep.subr.mxu0 0.0
      %1989 = vmatpush1.msra.mxu0 0.0
      %1990 = vmatprep.subr.mxu0 0.0
      %1991 = vmatpush1.msra.mxu0 0.0
      %1992 = vmatprep.subr.mxu0 0.0
      %1993 = vmatpush1.msra.mxu0 0.0
      %1994 = vmatprep.subr.mxu0 0.0
      %1995 = vmatpush1.msra.mxu0 0.0
      %1996 = vmatprep.mubr.f32.mxu0 0.0
      %v1997 = vand.u32 %v1722, 4294901760
      %v1998 = vsub.f32 %v1722, %v1997
      %1999 = vmatmul.mubr.f32.gmra.mrb[0].mxu0 %v1998
      %v2000 = vpop.f32.mrb[0].mxu0
      %v2001 = vadd.f32 %v1911, %v2000
      %v2002 = vpop.f32.mrb[0].mxu0
      %2003 = vmatprep.mubr.f32.mxu0 0.0
      %v2004 = vand.u32 %v1725, 4294901760
      %v2005 = vsub.f32 %v1725, %v2004
      %2006 = vmatmul.mubr.f32.gmra.mrb[0].mxu0 %v2005
      %v2007 = vpop.f32.mrb[0].mxu0
      %v2008 = vadd.f32 %v1917, %v2007
      %v2009 = vpop.f32.mrb[0].mxu0
      %2010 = vmatprep.mubr.f32.mxu0 0.0
      %v2011 = vand.u32 %v1728, 4294901760
      %v2012 = vsub.f32 %v1728, %v2011
      %2013 = vmatmul.mubr.f32.gmra.mrb[0].mxu0 %v2012
      %v2014 = vpop.f32.mrb[0].mxu0
      %v2015 = vadd.f32 %v1923, %v2014
      %v2016 = vpop.f32.mrb[0].mxu0
      %2017 = vdwg.mxu0
      %2018 = vmatprep.subr.mxu0 0.0
      %v2019 = vand.u32 %v1700, 4294901760
      %2020 = vmatpush1.msra.mxu0 %v2019
      %2021 = vmatprep.subr.mxu0 0.0
      %v2022 = vand.u32 %v1701, 4294901760
      %2023 = vmatpush1.msra.mxu0 %v2022
      %2024 = vmatprep.subr.mxu0 0.0
      %v2025 = vand.u32 %v1702, 4294901760
      %2026 = vmatpush1.msra.mxu0 %v2025
      %2027 = vmatprep.subr.mxu0 0.0
      %2028 = vmatpush1.msra.mxu0 0.0
      %2029 = vmatprep.subr.mxu0 0.0
      %2030 = vmatpush1.msra.mxu0 0.0
      %2031 = vmatprep.subr.mxu0 0.0
      %2032 = vmatpush1.msra.mxu0 0.0
      %2033 = vmatprep.subr.mxu0 0.0
      %2034 = vmatpush1.msra.mxu0 0.0
      %2035 = vmatprep.subr.mxu0 0.0
      %2036 = vmatpush1.msra.mxu0 0.0
      %2037 = vmatprep.subr.mxu0 0.0
      %2038 = vmatpush1.msra.mxu0 0.0
      %2039 = vmatprep.subr.mxu0 0.0
      %2040 = vmatpush1.msra.mxu0 0.0
      %2041 = vmatprep.subr.mxu0 0.0
      %2042 = vmatpush1.msra.mxu0 0.0
      %2043 = vmatprep.subr.mxu0 0.0
      %2044 = vmatpush1.msra.mxu0 0.0
      %2045 = vmatprep.subr.mxu0 0.0
      %2046 = vmatpush1.msra.mxu0 0.0
      %2047 = vmatprep.subr.mxu0 0.0
      %2048 = vmatpush1.msra.mxu0 0.0
      %2049 = vmatprep.subr.mxu0 0.0
      %2050 = vmatpush1.msra.mxu0 0.0
      %2051 = vmatprep.subr.mxu0 0.0
      %2052 = vmatpush1.msra.mxu0 0.0
      %2053 = vmatprep.subr.mxu0 0.0
      %2054 = vmatpush1.msra.mxu0 0.0
      %2055 = vmatprep.subr.mxu0 0.0
      %2056 = vmatpush1.msra.mxu0 0.0
      %2057 = vmatprep.subr.mxu0 0.0
      %2058 = vmatpush1.msra.mxu0 0.0
      %2059 = vmatprep.subr.mxu0 0.0
      %2060 = vmatpush1.msra.mxu0 0.0
      %2061 = vmatprep.subr.mxu0 0.0
      %2062 = vmatpush1.msra.mxu0 0.0
      %2063 = vmatprep.subr.mxu0 0.0
      %2064 = vmatpush1.msra.mxu0 0.0
      %2065 = vmatprep.subr.mxu0 0.0
      %2066 = vmatpush1.msra.mxu0 0.0
      %2067 = vmatprep.subr.mxu0 0.0
      %2068 = vmatpush1.msra.mxu0 0.0
      %2069 = vmatprep.subr.mxu0 0.0
      %2070 = vmatpush1.msra.mxu0 0.0
      %2071 = vmatprep.subr.mxu0 0.0
      %2072 = vmatpush1.msra.mxu0 0.0
      %2073 = vmatprep.subr.mxu0 0.0
      %2074 = vmatpush1.msra.mxu0 0.0
      %2075 = vmatprep.subr.mxu0 0.0
      %2076 = vmatpush1.msra.mxu0 0.0
      %2077 = vmatprep.subr.mxu0 0.0
      %2078 = vmatpush1.msra.mxu0 0.0
      %2079 = vmatprep.subr.mxu0 0.0
      %2080 = vmatpush1.msra.mxu0 0.0
      %2081 = vmatprep.subr.mxu0 0.0
      %2082 = vmatpush1.msra.mxu0 0.0
      %2083 = vmatprep.subr.mxu0 0.0
      %2084 = vmatpush1.msra.mxu0 0.0
      %2085 = vmatprep.mubr.f32.mxu0 0.0
      %v2086 = vand.u32 %v1722, 4294901760
      %v2087 = vsub.f32 %v1722, %v2086
      %v2088 = vand.u32 %v2087, 4294901760
      %2089 = vmatmul.mubr.f32.gmra.mrb[0].mxu0 %v2088
      %v2090 = vpop.f32.mrb[0].mxu0
      %v2091 = vadd.f32 %v2001, %v2090
      %v2092 = vpop.f32.mrb[0].mxu0
      %2093 = vmatprep.mubr.f32.mxu0 0.0
      %v2094 = vand.u32 %v1725, 4294901760
      %v2095 = vsub.f32 %v1725, %v2094
      %v2096 = vand.u32 %v2095, 4294901760
      %2097 = vmatmul.mubr.f32.gmra.mrb[0].mxu0 %v2096
      %v2098 = vpop.f32.mrb[0].mxu0
      %v2099 = vadd.f32 %v2008, %v2098
      %v2100 = vpop.f32.mrb[0].mxu0
      %2101 = vmatprep.mubr.f32.mxu0 0.0
      %v2102 = vand.u32 %v1728, 4294901760
      %v2103 = vsub.f32 %v1728, %v2102
      %v2104 = vand.u32 %v2103, 4294901760
      %2105 = vmatmul.mubr.f32.gmra.mrb[0].mxu0 %v2104
      %v2106 = vpop.f32.mrb[0].mxu0
      %v2107 = vadd.f32 %v2015, %v2106
      %v2108 = vpop.f32.mrb[0].mxu0
      %2109 = vdwg.mxu0
      %2110 = vmatprep.subr.mxu0 0.0
      %v2111 = vand.u32 %v1700, 4294901760
      %v2112 = vsub.f32 %v1700, %v2111
      %v2113 = vand.u32 %v2112, 4294901760
      %2114 = vmatpush1.msra.mxu0 %v2113
      %2115 = vmatprep.subr.mxu0 0.0
      %v2116 = vand.u32 %v1701, 4294901760
      %v2117 = vsub.f32 %v1701, %v2116
      %v2118 = vand.u32 %v2117, 4294901760
      %2119 = vmatpush1.msra.mxu0 %v2118
      %2120 = vmatprep.subr.mxu0 0.0
      %v2121 = vand.u32 %v1702, 4294901760
      %v2122 = vsub.f32 %v1702, %v2121
      %v2123 = vand.u32 %v2122, 4294901760
      %2124 = vmatpush1.msra.mxu0 %v2123
      %2125 = vmatprep.subr.mxu0 0.0
      %2126 = vmatpush1.msra.mxu0 0.0
      %2127 = vmatprep.subr.mxu0 0.0
      %2128 = vmatpush1.msra.mxu0 0.0
      %2129 = vmatprep.subr.mxu0 0.0
      %2130 = vmatpush1.msra.mxu0 0.0
      %2131 = vmatprep.subr.mxu0 0.0
      %2132 = vmatpush1.msra.mxu0 0.0
      %2133 = vmatprep.subr.mxu0 0.0
      %2134 = vmatpush1.msra.mxu0 0.0
      %2135 = vmatprep.subr.mxu0 0.0
      %2136 = vmatpush1.msra.mxu0 0.0
      %2137 = vmatprep.subr.mxu0 0.0
      %2138 = vmatpush1.msra.mxu0 0.0
      %2139 = vmatprep.subr.mxu0 0.0
      %2140 = vmatpush1.msra.mxu0 0.0
      %2141 = vmatprep.subr.mxu0 0.0
      %2142 = vmatpush1.msra.mxu0 0.0
      %2143 = vmatprep.subr.mxu0 0.0
      %2144 = vmatpush1.msra.mxu0 0.0
      %2145 = vmatprep.subr.mxu0 0.0
      %2146 = vmatpush1.msra.mxu0 0.0
      %2147 = vmatprep.subr.mxu0 0.0
      %2148 = vmatpush1.msra.mxu0 0.0
      %2149 = vmatprep.subr.mxu0 0.0
      %2150 = vmatpush1.msra.mxu0 0.0
      %2151 = vmatprep.subr.mxu0 0.0
      %2152 = vmatpush1.msra.mxu0 0.0
      %2153 = vmatprep.subr.mxu0 0.0
      %2154 = vmatpush1.msra.mxu0 0.0
      %2155 = vmatprep.subr.mxu0 0.0
      %2156 = vmatpush1.msra.mxu0 0.0
      %2157 = vmatprep.subr.mxu0 0.0
      %2158 = vmatpush1.msra.mxu0 0.0
      %2159 = vmatprep.subr.mxu0 0.0
      %2160 = vmatpush1.msra.mxu0 0.0
      %2161 = vmatprep.subr.mxu0 0.0
      %2162 = vmatpush1.msra.mxu0 0.0
      %2163 = vmatprep.subr.mxu0 0.0
      %2164 = vmatpush1.msra.mxu0 0.0
      %2165 = vmatprep.subr.mxu0 0.0
      %2166 = vmatpush1.msra.mxu0 0.0
      %2167 = vmatprep.subr.mxu0 0.0
      %2168 = vmatpush1.msra.mxu0 0.0
      %2169 = vmatprep.subr.mxu0 0.0
      %2170 = vmatpush1.msra.mxu0 0.0
      %2171 = vmatprep.subr.mxu0 0.0
      %2172 = vmatpush1.msra.mxu0 0.0
      %2173 = vmatprep.subr.mxu0 0.0
      %2174 = vmatpush1.msra.mxu0 0.0
      %2175 = vmatprep.subr.mxu0 0.0
      %2176 = vmatpush1.msra.mxu0 0.0
      %2177 = vmatprep.subr.mxu0 0.0
      %2178 = vmatpush1.msra.mxu0 0.0
      %2179 = vmatprep.subr.mxu0 0.0
      %2180 = vmatpush1.msra.mxu0 0.0
      %2181 = vmatprep.subr.mxu0 0.0
      %2182 = vmatpush1.msra.mxu0 0.0
      %2183 = vmatprep.mubr.f32.mxu0 0.0
      %v2184 = vand.u32 %v1722, 4294901760
      %2185 = vmatmul.mubr.f32.gmra.mrb[0].mxu0 %v2184
      %v2186 = vpop.f32.mrb[0].mxu0
      %v2187 = vadd.f32 %v2091, %v2186
      %v2188 = vpop.f32.mrb[0].mxu0
      %2189 = vmatprep.mubr.f32.mxu0 0.0
      %v2190 = vand.u32 %v1725, 4294901760
      %2191 = vmatmul.mubr.f32.gmra.mrb[0].mxu0 %v2190
      %v2192 = vpop.f32.mrb[0].mxu0
      %v2193 = vadd.f32 %v2099, %v2192
      %v2194 = vpop.f32.mrb[0].mxu0
      %2195 = vmatprep.mubr.f32.mxu0 0.0
      %v2196 = vand.u32 %v1728, 4294901760
      %2197 = vmatmul.mubr.f32.gmra.mrb[0].mxu0 %v2196
      %v2198 = vpop.f32.mrb[0].mxu0
      %v2199 = vadd.f32 %v2107, %v2198
      %v2200 = vpop.f32.mrb[0].mxu0
      %2201 = vdwg.mxu0
      %2202 = vmatprep.subr.mxu0 0.0
      %v2203 = vand.u32 %v1700, 4294901760
      %2204 = vmatpush1.msra.mxu0 %v2203
      %2205 = vmatprep.subr.mxu0 0.0
      %v2206 = vand.u32 %v1701, 4294901760
      %2207 = vmatpush1.msra.mxu0 %v2206
      %2208 = vmatprep.subr.mxu0 0.0
      %v2209 = vand.u32 %v1702, 4294901760
      %2210 = vmatpush1.msra.mxu0 %v2209
      %2211 = vmatprep.subr.mxu0 0.0
      %2212 = vmatpush1.msra.mxu0 0.0
      %2213 = vmatprep.subr.mxu0 0.0
      %2214 = vmatpush1.msra.mxu0 0.0
      %2215 = vmatprep.subr.mxu0 0.0
      %2216 = vmatpush1.msra.mxu0 0.0
      %2217 = vmatprep.subr.mxu0 0.0
      %2218 = vmatpush1.msra.mxu0 0.0
      %2219 = vmatprep.subr.mxu0 0.0
      %2220 = vmatpush1.msra.mxu0 0.0
      %2221 = vmatprep.subr.mxu0 0.0
      %2222 = vmatpush1.msra.mxu0 0.0
      %2223 = vmatprep.subr.mxu0 0.0
      %2224 = vmatpush1.msra.mxu0 0.0
      %2225 = vmatprep.subr.mxu0 0.0
      %2226 = vmatpush1.msra.mxu0 0.0
      %2227 = vmatprep.subr.mxu0 0.0
      %2228 = vmatpush1.msra.mxu0 0.0
      %2229 = vmatprep.subr.mxu0 0.0
      %2230 = vmatpush1.msra.mxu0 0.0
      %2231 = vmatprep.subr.mxu0 0.0
      %2232 = vmatpush1.msra.mxu0 0.0
      %2233 = vmatprep.subr.mxu0 0.0
      %2234 = vmatpush1.msra.mxu0 0.0
      %2235 = vmatprep.subr.mxu0 0.0
      %2236 = vmatpush1.msra.mxu0 0.0
      %2237 = vmatprep.subr.mxu0 0.0
      %2238 = vmatpush1.msra.mxu0 0.0
      %2239 = vmatprep.subr.mxu0 0.0
      %2240 = vmatpush1.msra.mxu0 0.0
      %2241 = vmatprep.subr.mxu0 0.0
      %2242 = vmatpush1.msra.mxu0 0.0
      %2243 = vmatprep.subr.mxu0 0.0
      %2244 = vmatpush1.msra.mxu0 0.0
      %2245 = vmatprep.subr.mxu0 0.0
      %2246 = vmatpush1.msra.mxu0 0.0
      %2247 = vmatprep.subr.mxu0 0.0
      %2248 = vmatpush1.msra.mxu0 0.0
      %2249 = vmatprep.subr.mxu0 0.0
      %2250 = vmatpush1.msra.mxu0 0.0
      %2251 = vmatprep.subr.mxu0 0.0
      %2252 = vmatpush1.msra.mxu0 0.0
      %2253 = vmatprep.subr.mxu0 0.0
      %2254 = vmatpush1.msra.mxu0 0.0
      %2255 = vmatprep.subr.mxu0 0.0
      %2256 = vmatpush1.msra.mxu0 0.0
      %2257 = vmatprep.subr.mxu0 0.0
      %2258 = vmatpush1.msra.mxu0 0.0
      %2259 = vmatprep.subr.mxu0 0.0
      %2260 = vmatpush1.msra.mxu0 0.0
      %2261 = vmatprep.subr.mxu0 0.0
      %2262 = vmatpush1.msra.mxu0 0.0
      %2263 = vmatprep.subr.mxu0 0.0
      %2264 = vmatpush1.msra.mxu0 0.0
      %2265 = vmatprep.subr.mxu0 0.0
      %2266 = vmatpush1.msra.mxu0 0.0
      %2267 = vmatprep.subr.mxu0 0.0
      %2268 = vmatpush1.msra.mxu0 0.0
      %2269 = vmatprep.mubr.f32.mxu0 0.0
      %v2270 = vand.u32 %v1722, 4294901760
      %2271 = vmatmul.mubr.f32.gmra.mrb[0].mxu0 %v2270
      %v2272 = vpop.f32.mrb[0].mxu0
      %v2273 = vadd.f32 %v2187, %v2272
      %v2274 = vpop.f32.mrb[0].mxu0
      %2275 = vmatprep.mubr.f32.mxu0 0.0
      %v2276 = vand.u32 %v1725, 4294901760
      %2277 = vmatmul.mubr.f32.gmra.mrb[0].mxu0 %v2276
      %v2278 = vpop.f32.mrb[0].mxu0
      %v2279 = vadd.f32 %v2193, %v2278
      %v2280 = vpop.f32.mrb[0].mxu0
      %2281 = vmatprep.mubr.f32.mxu0 0.0
      %v2282 = vand.u32 %v1728, 4294901760
      %2283 = vmatmul.mubr.f32.gmra.mrb[0].mxu0 %v2282
      %v2284 = vpop.f32.mrb[0].mxu0
      %v2285 = vadd.f32 %v2199, %v2284
      %v2286 = vpop.f32.mrb[0].mxu0
      %2287 = vdwg.mxu0
      %vm2288 = vcmask 64512
      %2289 = vst.msk [vmem:[%s242] sm:$0xff] %vm2288, %v2273
      %2290 = vst.msk [vmem:[%s242 + $0x8] sm:$0xff] %vm2288, %v2279
      %2291 = vst.msk [vmem:[%s242 + $0x10] sm:$0xff] %vm2288, %v2285
      %p2292 = scmp.lt.s32.totalorder %s19, 1
      %s2293 = scalar_select %p2292, %s19, 1
      %s2294 = smul.addr %s2293, 3
      %s2295 = smul.addr %s2294, 8
      %s2296 = scalar_lea.vmem %s4, %s2295
      // Predicated region
      $region37: #{tpu_custom_call.1} parent=35 // pred_check
        %p2297 = pneg %p141
      $region38: #{tpu_custom_call.1} parent=35 // pred_check_branch
        %2299 = sbr.rel (%p2297) target = $region40
      $region39: #{tpu_custom_call.1} parent=35 // pred_region
        _
      $region40: #{tpu_custom_call.1} parent=35 // pred_fallthru
        _
    $region36: #{tpu_custom_call.1} parent=5 // pred_fallthru
      _
    %p2300 = scmp.le.s32.totalorder 2, %s10
    // Predicated region
    $region41: #{tpu_custom_call.1} parent=5 // pred_check
      %p2301 = pneg %p2300
    $region42: #{tpu_custom_call.1} parent=5 // pred_check_branch
      %2303 = sbr.rel (%p2301) target = $region44
    $region43: #{tpu_custom_call.1} parent=5 // pred_region
      %s2304 = ssub.s32 %s10, 2
      // Predicated region
      $region45: #{tpu_custom_call.1} parent=43 // pred_check
        %p2305 = pneg %p147
      $region46: #{tpu_custom_call.1} parent=43 // pred_check_branch
        %2307 = sbr.rel (%p2305) target = $region48
      $region47: #{tpu_custom_call.1} parent=43 // pred_region
        %p2308 = scmp.lt.s32.totalorder %s21, 1
        %s2309 = scalar_select %p2308, %s21, 1
        %s2310 = smul.addr %s2309, 3
        %s2311 = smul.addr %s2310, 8
        %s2312 = scalar_lea.vmem %s4, %s2311
      $region48: #{tpu_custom_call.1} parent=43 // pred_fallthru
        _
    $region44: #{tpu_custom_call.1} parent=5 // pred_fallthru
      _
  $region6: #{tpu_custom_call.1} parent=0 // loop_footer
    %s14 = sadd.s32 1, %s10
  $region7: #{tpu_custom_call.1} parent=0 // loop_footer_branch
    %9 = sbr.rel target = $region3
  $region8: #{tpu_custom_call.1} parent=0 // loop_exit
    _

</llo_original>
